<compile_context>
chip_gen: v7x
topology: tpu7x:2x2x1
jax: 0.10.0
libtpu: 0.0.40
codegen_flags: <defaults>
</compile_context>

<pallas_src>
import functools

import jax
import jax.numpy as jnp
import numpy as np
from jax.experimental import pallas as pl
from jax.experimental.pallas import tpu as pltpu


def _mha_kernel(x_ref, y_ref, z_ref,
                wx_ref, wy_ref, wz_ref, t2_ref,
                blx_ref, bly_ref, bt_ref,
                hsel_ref, hselt_ref,
                out_ref,
                m_scr, l_scr, acc_scr):
    """One (batch-block, N-tile) step; online softmax over the N (reduction) axis."""
    nt = pl.program_id(1)
    n_tiles = pl.num_programs(1)

    Bb, Tn, Q = x_ref.shape
    M = y_ref.shape[1]
    H = hsel_ref.shape[1]
    D = Q // H
    f32 = jnp.float32

    @pl.when(nt == 0)
    def _init():
        m_scr[...] = jnp.full_like(m_scr, -jnp.inf)
        l_scr[...] = jnp.zeros_like(l_scr)
        acc_scr[...] = jnp.zeros_like(acc_scr)

    # Matmul operands in compute dtype (bf16 or f32); accumulation always f32.
    x = x_ref[...].astype(wx_ref.dtype).reshape(Bb * Tn, Q)
    y = y_ref[...].reshape(Bb * M, Q)
    z = z_ref[...].reshape(Bb * Tn * M, Q)

    # Fused projections: x through the MXU once -> [rx | t1x], z once -> [rz1 | rz2].
    xt = jnp.dot(x, wx_ref[...], preferred_element_type=f32)                  # (Bb*Tn, 2Q)
    rx = xt[:, :Q] + blx_ref[...]                                             # (Bb*Tn, Q)
    t1x = xt[:, Q:]                                                           # (Bb*Tn, Q)
    ry = jnp.dot(y, wy_ref[...], preferred_element_type=f32) + bly_ref[...]   # (Bb*M, Q)
    zz = jnp.dot(z, wz_ref[...], preferred_element_type=f32)                  # (Bb*Tn*M, 2Q)
    rz1 = zz[:, :Q].reshape(Bb, Tn, M, Q)
    rz2 = zz[:, Q:].reshape(Bb, Tn, M, Q)

    # score[b,n,m,h] = sum_d (rx+rz1)*(ry+rz2) ; per-head D-reduction on the MXU.
    a = rz1 + rx.reshape(Bb, Tn, 1, Q)
    b = rz2 + ry.reshape(Bb, 1, M, Q)
    prod = (a * b).reshape(Bb * Tn * M, Q)
    scores = jnp.dot(prod, hsel_ref[...], preferred_element_type=f32)         # (Bb*Tn*M, H)
    scores = scores.reshape(Bb, Tn, M, H) * (D ** -0.5)                       # scale_dot_att

    # Online softmax over N (torch softmax dim=-2); statistics kept in f32.
    m_prev = m_scr[...]                                                       # (Bb, M, H)
    m_new = jnp.maximum(m_prev, jnp.max(scores, axis=1))
    alpha = jnp.exp(m_prev - m_new)                                           # (Bb, M, H)
    p = jnp.exp(scores - m_new[:, None, :, :])                                # (Bb, Tn, M, H)
    l_scr[...] = alpha * l_scr[...] + jnp.sum(p, axis=1)
    m_scr[...] = m_new

    # Expand per-head weights back to Q lanes on the MXU and accumulate
    # r_unnorm[b,m,:] = alpha_exp * r_unnorm + sum_n p[b,n,m,head(.)] * t1x[b,n,:].
    p_exp = jnp.dot(p.reshape(Bb * Tn * M, H), hselt_ref[...],
                    preferred_element_type=f32).reshape(Bb, Tn, M, Q)
    alpha_exp = jnp.dot(alpha.reshape(Bb * M, H), hselt_ref[...],
                        preferred_element_type=f32).reshape(Bb, M, Q)
    contrib = jnp.sum(p_exp * t1x.reshape(Bb, Tn, 1, Q), axis=1)              # (Bb, M, Q)
    acc_scr[...] = alpha_exp * acc_scr[...] + contrib

    @pl.when(nt == n_tiles - 1)
    def _finalize():
        l_exp = jnp.dot(l_scr[...].reshape(Bb * M, H), hselt_ref[...],
                        preferred_element_type=f32)                           # (Bb*M, Q)
        r = (acc_scr[...].reshape(Bb * M, Q)
             * pl.reciprocal(l_exp, approx=True) + bt_ref[...])               # (Bb*M, Q)
        out = jnp.dot(r.astype(t2_ref.dtype), t2_ref[...],
                      preferred_element_type=f32)                             # (Bb*M, Q)
        out_ref[...] = out.reshape(Bb, M, Q).astype(out_ref.dtype)


def _const_spec(shape):
    """BlockSpec for operands identical at every grid step (weights, biases, hsel)."""
    index_map = lambda b, n: (0,) * len(shape)
    try:
        # Single-buffer constant blocks: fetched once, no wasted second VMEM buffer.
        return pl.BlockSpec(shape, index_map, pipeline_mode=pl.Buffered(1))
    except (TypeError, AttributeError):   # older jax without pipeline_mode
        return pl.BlockSpec(shape, index_map)


def mha_forward(x, y, z, params, *, b_blk=None, tile_n=None,
                compute_dtype=jnp.bfloat16):
    B, N, Q = x.shape
    M = y.shape[1]
    H, _, D = params["lambda_x"].shape
    assert H * D == Q
    dsize = jnp.dtype(compute_dtype).itemsize

    # --- tile selection -------------------------------------------------------
    if tile_n is None:
        # z tile (double-buffered, compute dtype) + ~6 same-shaped f32 temporaries
        # must stay comfortably under v7x's 64 MiB VMEM per TensorCore.
        budget = 40 * 2 ** 20
        per_row = M * Q * (2 * dsize + 6 * 4)
        cap_rows = max(8, budget // per_row)
        if N <= cap_rows:
            tile_n = N                                  # big tile (v5e/v6e friendly)
        else:
            cands = [t for t in range(8, N, 8) if N % t == 0 and t <= cap_rows]
            tile_n = max(cands) if cands else N
    assert N % tile_n == 0 and (tile_n == N or tile_n % 8 == 0)

    if b_blk is None:
        # Fill ~256 MXU rows per z matmul, but keep >=2 parallel grid steps when
        # B > 1 so both v7x TensorCores have work.
        want = max(1, 256 // max(1, tile_n * M))
        cap = max(1, B // 2) if B > 1 else 1
        b_blk = max(d for d in range(1, B + 1) if B % d == 0 and d <= min(want, cap))
    assert B % b_blk == 0

    # --- host-side weight folding --------------------------------------------
    def fold(w):  # (H, Q, D) -> (Q, H*D); column h*D+d holds w[h, :, d]
        return jnp.transpose(w, (1, 0, 2)).reshape(Q, Q)

    wx = jnp.concatenate([fold(params["lambda_x"]), fold(params["theta1"])], axis=1)
    wz = jnp.concatenate([fold(params["lambda_z1"]), fold(params["lambda_z2"])], axis=1)
    wy = fold(params["lambda_y"])
    # theta2 pre-transposed: row h*D+d holds theta2[h, :, d]  -> (Q, Q)
    t2 = jnp.transpose(params["theta2"], (0, 2, 1)).reshape(Q, Q)

    blx = params["bias_lambda_x"].reshape(1, Q).astype(jnp.float32)
    bly = params["bias_lambda_y"].reshape(1, Q).astype(jnp.float32)
    bt = params["bias_theta"].reshape(1, Q).astype(jnp.float32)

    # 0/1 head-selection matrix: hsel[h*D+d, h'] = (h == h').
    hsel = (jnp.repeat(jnp.arange(H), D)[:, None]
            == jnp.arange(H)[None, :]).astype(jnp.float32)          # (Q, H)
    hsel_t = hsel.T                                                  # (H, Q)

    # bf16 matmul operands (f32 accumulation in-kernel); halves z DMA bytes.
    yc = y.astype(compute_dtype)
    zc = z.astype(compute_dtype)
    wx = wx.astype(compute_dtype)
    wy = wy.astype(compute_dtype)
    wz = wz.astype(compute_dtype)
    t2 = t2.astype(compute_dtype)
    # x stays f32 in HBM (tiny); cast to compute dtype inside the kernel.

    grid = (B // b_blk, N // tile_n)

    in_specs = [
        pl.BlockSpec((b_blk, tile_n, Q), lambda b, n: (b, n, 0)),        # x
        pl.BlockSpec((b_blk, M, Q), lambda b, n: (b, 0, 0)),             # y
        pl.BlockSpec((b_blk, tile_n, M, Q), lambda b, n: (b, n, 0, 0)),  # z
        _const_spec((Q, 2 * Q)),      # [lambda_x || theta1]
        _const_spec((Q, Q)),          # lambda_y
        _const_spec((Q, 2 * Q)),      # [lambda_z1 || lambda_z2]
        _const_spec((Q, Q)),          # theta2 (pre-transposed)
        _const_spec((1, Q)),          # bias_lambda_x
        _const_spec((1, Q)),          # bias_lambda_y
        _const_spec((1, Q)),          # bias_theta
        _const_spec((Q, H)),          # head-selection matrix
        _const_spec((H, Q)),          # head-selection matrix, transposed
    ]
    out_spec = pl.BlockSpec((b_blk, M, Q), lambda b, n: (b, 0, 0))

    # VMEM request sized from the tile footprint; capped below v6e's 128 MiB and,
    # via the tile heuristic above, kept within v7x's 64 MiB.
    z_tile_f32 = b_blk * tile_n * M * Q * 4
    vmem_limit = int(min(100 * 2 ** 20, max(32 * 2 ** 20, 16 * z_tile_f32)))

    return pl.pallas_call(
        _mha_kernel,
        out_shape=jax.ShapeDtypeStruct((B, M, Q), jnp.float32),
        grid=grid,
        in_specs=in_specs,
        out_specs=out_spec,
        scratch_shapes=[
            pltpu.VMEM((b_blk, M, H), jnp.float32),   # running max (m)
            pltpu.VMEM((b_blk, M, H), jnp.float32),   # running denom (l)
            pltpu.VMEM((b_blk, M, Q), jnp.float32),   # unnormalized r accumulator
        ],
        compiler_params=pltpu.CompilerParams(
            dimension_semantics=("parallel", "arbitrary"),
            vmem_limit_bytes=vmem_limit),
    )(x, yc, zc, wx, wy, wz, t2, blx, bly, bt, hsel, hsel_t)


def mha_reference(x, y, z, p):
    D = p["lambda_x"].shape[-1]
    rx = jnp.einsum("bnq,hqd->bnhd", x, p["lambda_x"]) + p["bias_lambda_x"]
    ry = jnp.einsum("bmq,hqd->bmhd", y, p["lambda_y"]) + p["bias_lambda_y"]
    rz1 = jnp.einsum("bnmq,hqd->bnmhd", z, p["lambda_z1"])
    rz2 = jnp.einsum("bnmq,hqd->bnmhd", z, p["lambda_z2"])
    att = jnp.einsum("bnmhd,bnmhd->bhnm",
                     rx[:, :, None, :, :] + rz1,
                     ry[:, None, :, :, :] + rz2)
    att = att * (D ** -0.5)
    w = jax.nn.softmax(att, axis=-2)
    r = jnp.einsum("bhnm,bnq,hqd->bmhd", w, x, p["theta1"]) + p["bias_theta"]
    return jnp.einsum("bmhd,hqd->bmq", r, p["theta2"])


def init_params(key, hidden_dim, num_heads):
    head_dim = hidden_dim // num_heads
    ks = jax.random.split(key, 9)
    bound = float(np.sqrt(6.0 / (hidden_dim * head_dim + num_heads * head_dim)))

    def xavier(k):
        return jax.random.uniform(k, (num_heads, hidden_dim, head_dim),
                                  jnp.float32, -bound, bound)

    # Biases are zero-initialized in the torch module; small non-zero values here
    # so the bias-add path is actually exercised.
    def bias(k):
        return 0.01 * jax.random.normal(k, (num_heads, head_dim), jnp.float32)

    return {
        "lambda_x": xavier(ks[0]), "lambda_y": xavier(ks[1]),
        "lambda_z1": xavier(ks[2]), "lambda_z2": xavier(ks[3]),
        "theta1": xavier(ks[4]), "theta2": xavier(ks[5]),
        "bias_lambda_x": bias(ks[6]), "bias_lambda_y": bias(ks[7]),
        "bias_theta": bias(ks[8]),
    }


if __name__ == "__main__":
    B, N, M = 2, 16, 8
    hidden_dim, num_heads = 64, 8

    key = jax.random.PRNGKey(0)
    kx, ky, kz, kp = jax.random.split(key, 4)
    x = jax.random.normal(kx, (B, N, hidden_dim), jnp.float32)
    y = jax.random.normal(ky, (B, M, hidden_dim), jnp.float32)
    z = jax.random.normal(kz, (B, N, M, hidden_dim), jnp.float32)
    params = init_params(kp, hidden_dim, num_heads)

    ref = jax.block_until_ready(mha_reference(x, y, z, params))

    # f32 operands; tile_n=8 forces 2 N-tiles so the online-softmax path is exercised.
    run_f32 = jax.jit(functools.partial(mha_forward, compute_dtype=jnp.float32, tile_n=8))
    out_f32 = jax.block_until_ready(run_f32(x, y, z, params))
    np.testing.assert_allclose(np.asarray(out_f32), np.asarray(ref),
                               rtol=5e-3, atol=5e-3)

    # Default perf configuration: bf16 matmul operands (f32 accumulation and
    # softmax stats), so only operand rounding widens the error vs the f32 ref.
    run_bf16 = jax.jit(functools.partial(mha_forward, compute_dtype=jnp.bfloat16, tile_n=8))
    out_bf16 = jax.block_until_ready(run_bf16(x, y, z, params))
    np.testing.assert_allclose(np.asarray(out_bf16), np.asarray(ref),
                               rtol=5e-2, atol=5e-2)

    print("KERNEL_OK")
</pallas_src>

<mosaic_0001>
module attributes {stable_mosaic.version = 11 : i64} {
  func.func @_mha_kernel(%arg0: i32, %arg1: i32, %arg2: memref<1x8x64xf32, #tpu.memory_space<vmem>>, %arg3: memref<1x8x64xf32, #tpu.memory_space<vmem>>, %arg4: memref<1x8x8x64xf32, #tpu.memory_space<vmem>>, %arg5: memref<64x128xf32, #tpu.memory_space<vmem>>, %arg6: memref<64x64xf32, #tpu.memory_space<vmem>>, %arg7: memref<64x128xf32, #tpu.memory_space<vmem>>, %arg8: memref<64x64xf32, #tpu.memory_space<vmem>>, %arg9: memref<1x64xf32, #tpu.memory_space<vmem>>, %arg10: memref<1x64xf32, #tpu.memory_space<vmem>>, %arg11: memref<1x64xf32, #tpu.memory_space<vmem>>, %arg12: memref<64x8xf32, #tpu.memory_space<vmem>>, %arg13: memref<8x64xf32, #tpu.memory_space<vmem>>, %arg14: memref<1x8x64xf32, #tpu.memory_space<vmem>>, %arg15: memref<1x8x8xf32, #tpu.memory_space<vmem>>, %arg16: memref<1x8x8xf32, #tpu.memory_space<vmem>>, %arg17: memref<1x8x64xf32, #tpu.memory_space<vmem>>) attributes {dimension_semantics = [#tpu.dimension_semantics<parallel>, #tpu.dimension_semantics<arbitrary>], iteration_bounds = array<i64: 2, 2>, scalar_prefetch = 0 : i64, scratch_operands = 3 : i64, tpu.core_type = #tpu.core_type<tc>, window_params = [{transform_indices = @transform_0, window_bounds = array<i64: 1, 8, 64>}, {transform_indices = @transform_1, window_bounds = array<i64: 1, 8, 64>}, {transform_indices = @transform_2, window_bounds = array<i64: 1, 8, 8, 64>}, {pipeline_mode = #tpu.pipeline_mode<synchronous>, transform_indices = @transform_3, window_bounds = array<i64: 64, 128>}, {pipeline_mode = #tpu.pipeline_mode<synchronous>, transform_indices = @transform_4, window_bounds = array<i64: 64, 64>}, {pipeline_mode = #tpu.pipeline_mode<synchronous>, transform_indices = @transform_5, window_bounds = array<i64: 64, 128>}, {pipeline_mode = #tpu.pipeline_mode<synchronous>, transform_indices = @transform_6, window_bounds = array<i64: 64, 64>}, {pipeline_mode = #tpu.pipeline_mode<synchronous>, transform_indices = @transform_7, window_bounds = array<i64: 1, 64>}, {pipeline_mode = #tpu.pipeline_mode<synchronous>, transform_indices = @transform_8, window_bounds = array<i64: 1, 64>}, {pipeline_mode = #tpu.pipeline_mode<synchronous>, transform_indices = @transform_9, window_bounds = array<i64: 1, 64>}, {pipeline_mode = #tpu.pipeline_mode<synchronous>, transform_indices = @transform_10, window_bounds = array<i64: 64, 8>}, {pipeline_mode = #tpu.pipeline_mode<synchronous>, transform_indices = @transform_11, window_bounds = array<i64: 8, 64>}, {transform_indices = @transform_12, window_bounds = array<i64: 1, 8, 64>}]} {
    %c0_i32 = arith.constant 0 : i32
    %0 = arith.cmpi eq, %arg1, %c0_i32 : i32
    %1 = arith.extui %0 : i1 to i32
    %c0_i32_0 = arith.constant 0 : i32
    %2 = arith.cmpi ne, %1, %c0_i32_0 : i32
    scf.if %2 {
      %cst_54 = arith.constant 0xFF800000 : f32
      %74 = vector.broadcast %cst_54 : f32 to vector<1x8x8xf32>
      %c0_55 = arith.constant 0 : index
      %c0_56 = arith.constant 0 : index
      %c0_57 = arith.constant 0 : index
      %75 = vector.load %arg15[%c0_55, %c0_56, %c0_57] : memref<1x8x8xf32, #tpu.memory_space<vmem>>, vector<1x8x8xf32>
      tpu.vector_store %arg15[%c0_55, %c0_56, %c0_57], %74 {strides = array<i32>} : memref<1x8x8xf32, #tpu.memory_space<vmem>>, vector<1x8x8xf32>,
      %cst_58 = arith.constant 0.000000e+00 : f32
      %76 = vector.broadcast %cst_58 : f32 to vector<1x8x8xf32>
      %c0_59 = arith.constant 0 : index
      %c0_60 = arith.constant 0 : index
      %c0_61 = arith.constant 0 : index
      %77 = vector.load %arg16[%c0_59, %c0_60, %c0_61] : memref<1x8x8xf32, #tpu.memory_space<vmem>>, vector<1x8x8xf32>
      tpu.vector_store %arg16[%c0_59, %c0_60, %c0_61], %76 {strides = array<i32>} : memref<1x8x8xf32, #tpu.memory_space<vmem>>, vector<1x8x8xf32>,
      %cst_62 = arith.constant 0.000000e+00 : f32
      %78 = vector.broadcast %cst_62 : f32 to vector<1x8x64xf32>
      %c0_63 = arith.constant 0 : index
      %c0_64 = arith.constant 0 : index
      %c0_65 = arith.constant 0 : index
      %79 = vector.load %arg17[%c0_63, %c0_64, %c0_65] : memref<1x8x64xf32, #tpu.memory_space<vmem>>, vector<1x8x64xf32>
      tpu.vector_store %arg17[%c0_63, %c0_64, %c0_65], %78 {strides = array<i32>} : memref<1x8x64xf32, #tpu.memory_space<vmem>>, vector<1x8x64xf32>,
    } else {
    }
    %c0 = arith.constant 0 : index
    %c0_1 = arith.constant 0 : index
    %c0_2 = arith.constant 0 : index
    %3 = vector.load %arg2[%c0, %c0_1, %c0_2] : memref<1x8x64xf32, #tpu.memory_space<vmem>>, vector<1x8x64xf32>
    %4 = vector.shape_cast %3 : vector<1x8x64xf32> to vector<8x64xf32>
    %c0_3 = arith.constant 0 : index
    %c0_4 = arith.constant 0 : index
    %c0_5 = arith.constant 0 : index
    %5 = vector.load %arg3[%c0_3, %c0_4, %c0_5] : memref<1x8x64xf32, #tpu.memory_space<vmem>>, vector<1x8x64xf32>
    %6 = vector.shape_cast %5 : vector<1x8x64xf32> to vector<8x64xf32>
    %c0_6 = arith.constant 0 : index
    %c0_7 = arith.constant 0 : index
    %c0_8 = arith.constant 0 : index
    %c0_9 = arith.constant 0 : index
    %7 = vector.load %arg4[%c0_6, %c0_7, %c0_8, %c0_9] : memref<1x8x8x64xf32, #tpu.memory_space<vmem>>, vector<1x8x8x64xf32>
    %8 = vector.shape_cast %7 : vector<1x8x8x64xf32> to vector<64x64xf32>
    %c0_10 = arith.constant 0 : index
    %c0_11 = arith.constant 0 : index
    %9 = vector.load %arg5[%c0_10, %c0_11] : memref<64x128xf32, #tpu.memory_space<vmem>>, vector<64x128xf32>
    %cst = arith.constant dense<0.000000e+00> : vector<8x128xf32>
    %10 = tpu.matmul %4, %9, %cst {dimension_numbers = #tpu.dot_dimension_numbers<[1], [0], [0], [1], [0, 0, 1, 1], [], []>} : vector<8x64xf32>, vector<64x128xf32>, vector<8x128xf32> -> vector<8x128xf32>
    %11 = vector.extract_strided_slice %10 {offsets = [0, 0], sizes = [8, 64], strides = [1, 1]} : vector<8x128xf32> to vector<8x64xf32>
    %c0_12 = arith.constant 0 : index
    %c0_13 = arith.constant 0 : index
    %12 = vector.load %arg9[%c0_12, %c0_13] : memref<1x64xf32, #tpu.memory_space<vmem>>, vector<1x64xf32>
    %13 = vector.broadcast %12 : vector<1x64xf32> to vector<8x64xf32>
    %14 = arith.addf %11, %13 : vector<8x64xf32>
    %15 = vector.extract_strided_slice %10 {offsets = [0, 64], sizes = [8, 64], strides = [1, 1]} : vector<8x128xf32> to vector<8x64xf32>
    %c0_14 = arith.constant 0 : index
    %c0_15 = arith.constant 0 : index
    %16 = vector.load %arg6[%c0_14, %c0_15] : memref<64x64xf32, #tpu.memory_space<vmem>>, vector<64x64xf32>
    %cst_16 = arith.constant dense<0.000000e+00> : vector<8x64xf32>
    %17 = tpu.matmul %6, %16, %cst_16 {dimension_numbers = #tpu.dot_dimension_numbers<[1], [0], [0], [1], [0, 0, 1, 1], [], []>} : vector<8x64xf32>, vector<64x64xf32>, vector<8x64xf32> -> vector<8x64xf32>
    %c0_17 = arith.constant 0 : index
    %c0_18 = arith.constant 0 : index
    %18 = vector.load %arg10[%c0_17, %c0_18] : memref<1x64xf32, #tpu.memory_space<vmem>>, vector<1x64xf32>
    %19 = vector.broadcast %18 : vector<1x64xf32> to vector<8x64xf32>
    %20 = arith.addf %17, %19 : vector<8x64xf32>
    %c0_19 = arith.constant 0 : index
    %c0_20 = arith.constant 0 : index
    %21 = vector.load %arg7[%c0_19, %c0_20] : memref<64x128xf32, #tpu.memory_space<vmem>>, vector<64x128xf32>
    %cst_21 = arith.constant dense<0.000000e+00> : vector<64x128xf32>
    %22 = tpu.matmul %8, %21, %cst_21 {dimension_numbers = #tpu.dot_dimension_numbers<[1], [0], [0], [1], [0, 0, 1, 1], [], []>} : vector<64x64xf32>, vector<64x128xf32>, vector<64x128xf32> -> vector<64x128xf32>
    %23 = vector.extract_strided_slice %22 {offsets = [0, 0], sizes = [64, 64], strides = [1, 1]} : vector<64x128xf32> to vector<64x64xf32>
    %24 = vector.shape_cast %23 : vector<64x64xf32> to vector<1x8x8x64xf32>
    %25 = vector.extract_strided_slice %22 {offsets = [0, 64], sizes = [64, 64], strides = [1, 1]} : vector<64x128xf32> to vector<64x64xf32>
    %26 = vector.shape_cast %25 : vector<64x64xf32> to vector<1x8x8x64xf32>
    %27 = vector.shape_cast %14 : vector<8x64xf32> to vector<1x8x1x64xf32>
    %28 = vector.broadcast %27 : vector<1x8x1x64xf32> to vector<1x8x8x64xf32>
    %29 = arith.addf %24, %28 : vector<1x8x8x64xf32>
    %30 = vector.shape_cast %20 : vector<8x64xf32> to vector<1x1x8x64xf32>
    %31 = vector.broadcast %30 : vector<1x1x8x64xf32> to vector<1x8x8x64xf32>
    %32 = arith.addf %26, %31 : vector<1x8x8x64xf32>
    %33 = arith.mulf %29, %32 : vector<1x8x8x64xf32>
    %34 = vector.shape_cast %33 : vector<1x8x8x64xf32> to vector<64x64xf32>
    %c0_22 = arith.constant 0 : index
    %c0_23 = arith.constant 0 : index
    %35 = vector.load %arg12[%c0_22, %c0_23] : memref<64x8xf32, #tpu.memory_space<vmem>>, vector<64x8xf32>
    %cst_24 = arith.constant dense<0.000000e+00> : vector<64x8xf32>
    %36 = tpu.matmul %34, %35, %cst_24 {dimension_numbers = #tpu.dot_dimension_numbers<[1], [0], [0], [1], [0, 0, 1, 1], [], []>} : vector<64x64xf32>, vector<64x8xf32>, vector<64x8xf32> -> vector<64x8xf32>
    %37 = vector.shape_cast %36 : vector<64x8xf32> to vector<1x8x8x8xf32>
    %cst_25 = arith.constant 0.353553385 : f32
    %38 = vector.broadcast %cst_25 : f32 to vector<1x8x8x8xf32>
    %39 = arith.mulf %37, %38 : vector<1x8x8x8xf32>
    %c0_26 = arith.constant 0 : index
    %c0_27 = arith.constant 0 : index
    %c0_28 = arith.constant 0 : index
    %40 = vector.load %arg15[%c0_26, %c0_27, %c0_28] : memref<1x8x8xf32, #tpu.memory_space<vmem>>, vector<1x8x8xf32>
    %cst_29 = arith.constant dense<0xFF800000> : vector<1x8x8xf32>
    %41 = vector.multi_reduction <maximumf>, %39, %cst_29 [1] : vector<1x8x8x8xf32> to vector<1x8x8xf32>
    %42 = arith.maximumf %40, %41 : vector<1x8x8xf32>
    %43 = arith.subf %40, %42 : vector<1x8x8xf32>
    %44 = math.exp %43 : vector<1x8x8xf32>
    %45 = vector.shape_cast %42 : vector<1x8x8xf32> to vector<1x1x8x8xf32>
    %46 = vector.broadcast %45 : vector<1x1x8x8xf32> to vector<1x8x8x8xf32>
    %47 = arith.subf %39, %46 : vector<1x8x8x8xf32>
    %48 = math.exp %47 : vector<1x8x8x8xf32>
    %c0_30 = arith.constant 0 : index
    %c0_31 = arith.constant 0 : index
    %c0_32 = arith.constant 0 : index
    %49 = vector.load %arg16[%c0_30, %c0_31, %c0_32] : memref<1x8x8xf32, #tpu.memory_space<vmem>>, vector<1x8x8xf32>
    %50 = arith.mulf %44, %49 : vector<1x8x8xf32>
    %cst_33 = arith.constant dense<0.000000e+00> : vector<1x8x8xf32>
    %51 = vector.multi_reduction <add>, %48, %cst_33 [1] : vector<1x8x8x8xf32> to vector<1x8x8xf32>
    %52 = arith.addf %50, %51 : vector<1x8x8xf32>
    %c0_34 = arith.constant 0 : index
    %c0_35 = arith.constant 0 : index
    %c0_36 = arith.constant 0 : index
    %53 = vector.load %arg16[%c0_34, %c0_35, %c0_36] : memref<1x8x8xf32, #tpu.memory_space<vmem>>, vector<1x8x8xf32>
    tpu.vector_store %arg16[%c0_34, %c0_35, %c0_36], %52 {strides = array<i32>} : memref<1x8x8xf32, #tpu.memory_space<vmem>>, vector<1x8x8xf32>,
    %c0_37 = arith.constant 0 : index
    %c0_38 = arith.constant 0 : index
    %c0_39 = arith.constant 0 : index
    %54 = vector.load %arg15[%c0_37, %c0_38, %c0_39] : memref<1x8x8xf32, #tpu.memory_space<vmem>>, vector<1x8x8xf32>
    tpu.vector_store %arg15[%c0_37, %c0_38, %c0_39], %42 {strides = array<i32>} : memref<1x8x8xf32, #tpu.memory_space<vmem>>, vector<1x8x8xf32>,
    %55 = vector.shape_cast %48 : vector<1x8x8x8xf32> to vector<64x8xf32>
    %c0_40 = arith.constant 0 : index
    %c0_41 = arith.constant 0 : index
    %56 = vector.load %arg13[%c0_40, %c0_41] : memref<8x64xf32, #tpu.memory_space<vmem>>, vector<8x64xf32>
    %cst_42 = arith.constant dense<0.000000e+00> : vector<64x64xf32>
    %57 = tpu.matmul %55, %56, %cst_42 {dimension_numbers = #tpu.dot_dimension_numbers<[1], [0], [0], [1], [0, 0, 1, 1], [], []>} : vector<64x8xf32>, vector<8x64xf32>, vector<64x64xf32> -> vector<64x64xf32>
    %58 = vector.shape_cast %57 : vector<64x64xf32> to vector<1x8x8x64xf32>
    %59 = vector.shape_cast %44 : vector<1x8x8xf32> to vector<8x8xf32>
    %c0_43 = arith.constant 0 : index
    %c0_44 = arith.constant 0 : index
    %60 = vector.load %arg13[%c0_43, %c0_44] : memref<8x64xf32, #tpu.memory_space<vmem>>, vector<8x64xf32>
    %cst_45 = arith.constant dense<0.000000e+00> : vector<8x64xf32>
    %61 = tpu.matmul %59, %60, %cst_45 {dimension_numbers = #tpu.dot_dimension_numbers<[1], [0], [0], [1], [0, 0, 1, 1], [], []>} : vector<8x8xf32>, vector<8x64xf32>, vector<8x64xf32> -> vector<8x64xf32>
    %62 = vector.shape_cast %61 : vector<8x64xf32> to vector<1x8x64xf32>
    %63 = vector.shape_cast %15 : vector<8x64xf32> to vector<1x8x1x64xf32>
    %64 = vector.broadcast %63 : vector<1x8x1x64xf32> to vector<1x8x8x64xf32>
    %65 = arith.mulf %58, %64 : vector<1x8x8x64xf32>
    %cst_46 = arith.constant dense<0.000000e+00> : vector<1x8x64xf32>
    %66 = vector.multi_reduction <add>, %65, %cst_46 [1] : vector<1x8x8x64xf32> to vector<1x8x64xf32>
    %c0_47 = arith.constant 0 : index
    %c0_48 = arith.constant 0 : index
    %c0_49 = arith.constant 0 : index
    %67 = vector.load %arg17[%c0_47, %c0_48, %c0_49] : memref<1x8x64xf32, #tpu.memory_space<vmem>>, vector<1x8x64xf32>
    %68 = arith.mulf %62, %67 : vector<1x8x64xf32>
    %69 = arith.addf %68, %66 : vector<1x8x64xf32>
    %c0_50 = arith.constant 0 : index
    %c0_51 = arith.constant 0 : index
    %c0_52 = arith.constant 0 : index
    %70 = vector.load %arg17[%c0_50, %c0_51, %c0_52] : memref<1x8x64xf32, #tpu.memory_space<vmem>>, vector<1x8x64xf32>
    tpu.vector_store %arg17[%c0_50, %c0_51, %c0_52], %69 {strides = array<i32>} : memref<1x8x64xf32, #tpu.memory_space<vmem>>, vector<1x8x64xf32>,
    %c1_i32 = arith.constant 1 : i32
    %71 = arith.cmpi eq, %arg1, %c1_i32 : i32
    %72 = arith.extui %71 : i1 to i32
    %c0_i32_53 = arith.constant 0 : i32
    %73 = arith.cmpi ne, %72, %c0_i32_53 : i32
    scf.if %73 {
      %c0_54 = arith.constant 0 : index
      %c0_55 = arith.constant 0 : index
      %c0_56 = arith.constant 0 : index
      %74 = vector.load %arg16[%c0_54, %c0_55, %c0_56] : memref<1x8x8xf32, #tpu.memory_space<vmem>>, vector<1x8x8xf32>
      %75 = vector.shape_cast %74 : vector<1x8x8xf32> to vector<8x8xf32>
      %c0_57 = arith.constant 0 : index
      %c0_58 = arith.constant 0 : index
      %76 = vector.load %arg13[%c0_57, %c0_58] : memref<8x64xf32, #tpu.memory_space<vmem>>, vector<8x64xf32>
      %cst_59 = arith.constant dense<0.000000e+00> : vector<8x64xf32>
      %77 = tpu.matmul %75, %76, %cst_59 {dimension_numbers = #tpu.dot_dimension_numbers<[1], [0], [0], [1], [0, 0, 1, 1], [], []>} : vector<8x8xf32>, vector<8x64xf32>, vector<8x64xf32> -> vector<8x64xf32>
      %c0_60 = arith.constant 0 : index
      %c0_61 = arith.constant 0 : index
      %c0_62 = arith.constant 0 : index
      %78 = vector.load %arg17[%c0_60, %c0_61, %c0_62] : memref<1x8x64xf32, #tpu.memory_space<vmem>>, vector<1x8x64xf32>
      %79 = vector.shape_cast %78 : vector<1x8x64xf32> to vector<8x64xf32>
      %80 = tpu.reciprocal %77 {approx = true} : vector<8x64xf32> -> vector<8x64xf32>
      %81 = arith.mulf %79, %80 : vector<8x64xf32>
      %c0_63 = arith.constant 0 : index
      %c0_64 = arith.constant 0 : index
      %82 = vector.load %arg11[%c0_63, %c0_64] : memref<1x64xf32, #tpu.memory_space<vmem>>, vector<1x64xf32>
      %83 = vector.broadcast %82 : vector<1x64xf32> to vector<8x64xf32>
      %84 = arith.addf %81, %83 : vector<8x64xf32>
      %c0_65 = arith.constant 0 : index
      %c0_66 = arith.constant 0 : index
      %85 = vector.load %arg8[%c0_65, %c0_66] : memref<64x64xf32, #tpu.memory_space<vmem>>, vector<64x64xf32>
      %cst_67 = arith.constant dense<0.000000e+00> : vector<8x64xf32>
      %86 = tpu.matmul %84, %85, %cst_67 {dimension_numbers = #tpu.dot_dimension_numbers<[1], [0], [0], [1], [0, 0, 1, 1], [], []>} : vector<8x64xf32>, vector<64x64xf32>, vector<8x64xf32> -> vector<8x64xf32>
      %87 = vector.shape_cast %86 : vector<8x64xf32> to vector<1x8x64xf32>
      %c0_68 = arith.constant 0 : index
      %c0_69 = arith.constant 0 : index
      %c0_70 = arith.constant 0 : index
      %88 = vector.load %arg14[%c0_68, %c0_69, %c0_70] : memref<1x8x64xf32, #tpu.memory_space<vmem>>, vector<1x8x64xf32>
      tpu.vector_store %arg14[%c0_68, %c0_69, %c0_70], %87 {strides = array<i32>} : memref<1x8x64xf32, #tpu.memory_space<vmem>>, vector<1x8x64xf32>,
    } else {
    }
    return
  }
  func.func @transform_0(%arg0: i32, %arg1: i32) -> (i32, i32, i32) {
    %c0_i32 = arith.constant 0 : i32
    %c0_i32_0 = arith.constant 0 : i32
    return %arg0, %arg1, %c0_i32 : i32, i32, i32
  }
  func.func @transform_1(%arg0: i32, %arg1: i32) -> (i32, i32, i32) {
    %c0_i32 = arith.constant 0 : i32
    %c0_i32_0 = arith.constant 0 : i32
    %c0_i32_1 = arith.constant 0 : i32
    return %arg0, %c0_i32, %c0_i32_0 : i32, i32, i32
  }
  func.func @transform_2(%arg0: i32, %arg1: i32) -> (i32, i32, i32, i32) {
    %c0_i32 = arith.constant 0 : i32
    %c0_i32_0 = arith.constant 0 : i32
    %c0_i32_1 = arith.constant 0 : i32
    return %arg0, %arg1, %c0_i32, %c0_i32_0 : i32, i32, i32, i32
  }
  func.func @transform_3(%arg0: i32, %arg1: i32) -> (i32, i32) {
    %c0_i32 = arith.constant 0 : i32
    %c0_i32_0 = arith.constant 0 : i32
    %c0_i32_1 = arith.constant 0 : i32
    return %c0_i32, %c0_i32_0 : i32, i32
  }
  func.func @transform_4(%arg0: i32, %arg1: i32) -> (i32, i32) {
    %c0_i32 = arith.constant 0 : i32
    %c0_i32_0 = arith.constant 0 : i32
    %c0_i32_1 = arith.constant 0 : i32
    return %c0_i32, %c0_i32_0 : i32, i32
  }
  func.func @transform_5(%arg0: i32, %arg1: i32) -> (i32, i32) {
    %c0_i32 = arith.constant 0 : i32
    %c0_i32_0 = arith.constant 0 : i32
    %c0_i32_1 = arith.constant 0 : i32
    return %c0_i32, %c0_i32_0 : i32, i32
  }
  func.func @transform_6(%arg0: i32, %arg1: i32) -> (i32, i32) {
    %c0_i32 = arith.constant 0 : i32
    %c0_i32_0 = arith.constant 0 : i32
    %c0_i32_1 = arith.constant 0 : i32
    return %c0_i32, %c0_i32_0 : i32, i32
  }
  func.func @transform_7(%arg0: i32, %arg1: i32) -> (i32, i32) {
    %c0_i32 = arith.constant 0 : i32
    %c0_i32_0 = arith.constant 0 : i32
    %c0_i32_1 = arith.constant 0 : i32
    return %c0_i32, %c0_i32_0 : i32, i32
  }
  func.func @transform_8(%arg0: i32, %arg1: i32) -> (i32, i32) {
    %c0_i32 = arith.constant 0 : i32
    %c0_i32_0 = arith.constant 0 : i32
    %c0_i32_1 = arith.constant 0 : i32
    return %c0_i32, %c0_i32_0 : i32, i32
  }
  func.func @transform_9(%arg0: i32, %arg1: i32) -> (i32, i32) {
    %c0_i32 = arith.constant 0 : i32
    %c0_i32_0 = arith.constant 0 : i32
    %c0_i32_1 = arith.constant 0 : i32
    return %c0_i32, %c0_i32_0 : i32, i32
  }
  func.func @transform_10(%arg0: i32, %arg1: i32) -> (i32, i32) {
    %c0_i32 = arith.constant 0 : i32
    %c0_i32_0 = arith.constant 0 : i32
    %c0_i32_1 = arith.constant 0 : i32
    return %c0_i32, %c0_i32_0 : i32, i32
  }
  func.func @transform_11(%arg0: i32, %arg1: i32) -> (i32, i32) {
    %c0_i32 = arith.constant 0 : i32
    %c0_i32_0 = arith.constant 0 : i32
    %c0_i32_1 = arith.constant 0 : i32
    return %c0_i32, %c0_i32_0 : i32, i32
  }
  func.func @transform_12(%arg0: i32, %arg1: i32) -> (i32, i32, i32) {
    %c0_i32 = arith.constant 0 : i32
    %c0_i32_0 = arith.constant 0 : i32
    %c0_i32_1 = arith.constant 0 : i32
    return %arg0, %c0_i32, %c0_i32_0 : i32, i32, i32
  }
}

</mosaic_0001>

<llo_original>
// kernel: eq.8
$region0: #{eq.8}
  %s0 = inlined_call_operand.vmem [shape: s32[8,8], index: 0, kind: input, shape index: {}]
  %s1 = inlined_call_operand.vmem [shape: s32[64], index: 1, kind: output, shape index: {}]
  $region1: #{eq.8} parent=0
    #allocation0 [shape = 'u8[4096]{0}', space=vmem, size = 0x1000, scoped, tag = 'scoped mem for output reshape']
    %v2 = vld [vmem:[%s0] sm:$0x1]
    %vm3 = vcmask 64512
    %4 = vst.msk [vmem:[#allocation0] sm:$0x1] %vm3, %v2
    %s5 = scalar_lea.vmem %s0, 7
    %v6 = vld [vmem:[%s5] sm:$0x1]
    %7 = vrot.lane.b32.xlu0 %v6, 56
    %v8 = vpop.permute.xlu0 %7
    %vm9 = vcmask 523712
    %10 = vst.msk [vmem:[#allocation0] sm:$0x1] %vm9, %v8
    %s11 = scalar_lea.vmem %s0, 6
    %v12 = vld [vmem:[%s11] sm:$0x1]
    %13 = vrot.lane.b32.xlu0 %v12, 48
    %v14 = vpop.permute.xlu0 %13
    %vm15 = vcmask 458112
    %16 = vst.msk [vmem:[#allocation0] sm:$0x1] %vm15, %v14
    %s17 = scalar_lea.vmem %s0, 5
    %v18 = vld [vmem:[%s17] sm:$0x1]
    %19 = vrot.lane.b32.xlu0 %v18, 40
    %v20 = vpop.permute.xlu0 %19
    %vm21 = vcmask 392512
    %22 = vst.msk [vmem:[#allocation0] sm:$0x1] %vm21, %v20
    %s23 = scalar_lea.vmem %s0, 4
    %v24 = vld [vmem:[%s23] sm:$0x1]
    %25 = vrot.lane.b32.xlu0 %v24, 32
    %v26 = vpop.permute.xlu0 %25
    %vm27 = vcmask 326912
    %28 = vst.msk [vmem:[#allocation0] sm:$0x1] %vm27, %v26
    %s29 = scalar_lea.vmem %s0, 3
    %v30 = vld [vmem:[%s29] sm:$0x1]
    %31 = vrot.lane.b32.xlu0 %v30, 24
    %v32 = vpop.permute.xlu0 %31
    %vm33 = vcmask 261312
    %34 = vst.msk [vmem:[#allocation0] sm:$0x1] %vm33, %v32
    %s35 = scalar_lea.vmem %s0, 2
    %v36 = vld [vmem:[%s35] sm:$0x1]
    %37 = vrot.lane.b32.xlu0 %v36, 16
    %v38 = vpop.permute.xlu0 %37
    %vm39 = vcmask 195712
    %40 = vst.msk [vmem:[#allocation0] sm:$0x1] %vm39, %v38
    %s41 = scalar_lea.vmem %s0, 1
    %v42 = vld [vmem:[%s41] sm:$0x1]
    %43 = vrot.lane.b32.xlu0 %v42, 8
    %v44 = vpop.permute.xlu0 %43
    %vm45 = vcmask 130112
    %46 = vst.msk [vmem:[#allocation0] sm:$0x1] %vm45, %v44
    %s48 = sshllo.u32 0, 1
    %v50 = vld [vmem:[#allocation0] sm:%s48]
    %s51 = sshllo.u32 0, 1
    %52 = vst [vmem:[%s1] sm:%s51] %v50

// kernel: mha_forward.1
$region0: #{mha_forward.1}
  #allocation0 [shape = 'u32[]', space=smem, size = 0x4, offset = 0x4, fixed_abs, tag = 'smem constant byte address 0x4 - core index']
  #allocation1 [shape = 'u32[144,128]{1,0:T(1,128)}', space=vmem, size = 0x12000, scoped, tag = 'internal scratch']
  #allocation2 [shape = 'f32[1,8,8]{2,1,0:T(8,128)}', space=vmem, size = 0x1000, scoped, tag = 'scratch operand']
  #allocation3 [shape = 'f32[1,8,8]{2,1,0:T(8,128)}', space=vmem, size = 0x1000, scoped, tag = 'scratch operand']
  #allocation4 [shape = 'f32[1,8,64]{2,1,0:T(8,128)}', space=vmem, size = 0x1000, scoped, tag = 'scratch operand']
  %s0 = inlined_call_operand.vmem [shape: f32[2,16,64], index: 0, kind: input, shape index: {}]
  %s1 = inlined_call_operand.vmem [shape: f32[2,8,64], index: 1, kind: input, shape index: {}]
  %s2 = inlined_call_operand.vmem [shape: f32[2,16,8,64], index: 2, kind: input, shape index: {}]
  %s3 = inlined_call_operand.vmem [shape: f32[64,128], index: 3, kind: input, shape index: {}]
  %s4 = inlined_call_operand.vmem [shape: f32[64,64], index: 4, kind: input, shape index: {}]
  %s5 = inlined_call_operand.vmem [shape: f32[64,128], index: 5, kind: input, shape index: {}]
  %s6 = inlined_call_operand.vmem [shape: f32[64,64], index: 6, kind: input, shape index: {}]
  %s7 = inlined_call_operand.vmem [shape: f32[1,64], index: 7, kind: input, shape index: {}]
  %s8 = inlined_call_operand.vmem [shape: f32[1,64], index: 8, kind: input, shape index: {}]
  %s9 = inlined_call_operand.vmem [shape: f32[1,64], index: 9, kind: input, shape index: {}]
  %s10 = inlined_call_operand.vmem [shape: f32[64,8], index: 10, kind: input, shape index: {}]
  %s11 = inlined_call_operand.vmem [shape: f32[8,64], index: 11, kind: input, shape index: {}]
  %s12 = inlined_call_operand.hbm [shape: f32[2,8,64], index: 12, kind: output, shape index: {}]
  %s13 = sld [smem:[#allocation0]]
  $region89: #{mha_forward.1} parent=0
    _
  %s15 = ssub.s32 1, %s13
  %s16 = scalar_select 0, %s15, %s13
  $region1: #{mha_forward.1} parent=0
    #allocation5 [shape = 'u8[8192]{0}', space=vmem, size = 0x2000, scoped, tag = 'output window, operand 0']
    #allocation6 [shape = 's32[2]{0}', space=sflag, size = 0x8, scoped, tag = 'scoped memory for mha_forward.1']
    %17 = vsyncpa [#allocation6], 0
    %s18 = scalar_lea.sflag [#allocation6], 1
    %19 = vsyncpa %s18, 0
    loop: start=0, step=1, limit=6
    $region2: #{mha_forward.1} parent=1 // loop_pre_header
      _
    $region3: #{mha_forward.1} parent=1 // loop_header
      %s21 = sphi 0, %s25
      %p22 = scmp.ge.s32.totalorder %s21, 6
      %s28 = sphi 0, %s40
      %s29 = sphi 0, %s36
      %s30 = sphi 0, %s28
      %s31 = sphi 0, %s29
      %s32 = sphi 0, %s30
      %s33 = sphi 0, %s31
      %s45 = sphi 0, %s47
      %s48 = sphi 0, %s45
      %s49 = sphi 0, %s48
      %s65 = sphi 0, %s49
      %s71 = sphi 0, %s73
      %s74 = sphi 0, %s71
      %s75 = sphi 0, %s74
      %s91 = sphi 0, %s75
      %s99 = sphi 0, %s101
      %s102 = sphi 0, %s99
      %s103 = sphi 0, %s102
      %s119 = sphi 0, %s103
      %s123 = sphi 0, %s123
      %s125 = sphi 0, %s123
      %s126 = sphi 0, %s125
      %s140 = sphi 0, %s126
      %s144 = sphi 0, %s144
      %s146 = sphi 0, %s144
      %s147 = sphi 0, %s146
      %s161 = sphi 0, %s147
      %s165 = sphi 0, %s165
      %s167 = sphi 0, %s165
      %s168 = sphi 0, %s167
      %s182 = sphi 0, %s168
      %s186 = sphi 0, %s186
      %s188 = sphi 0, %s186
      %s189 = sphi 0, %s188
      %s203 = sphi 0, %s189
      %s207 = sphi 0, %s207
      %s209 = sphi 0, %s207
      %s210 = sphi 0, %s209
      %s224 = sphi 0, %s210
      %s228 = sphi 0, %s228
      %s230 = sphi 0, %s228
      %s231 = sphi 0, %s230
      %s245 = sphi 0, %s231
      %s249 = sphi 0, %s249
      %s251 = sphi 0, %s249
      %s252 = sphi 0, %s251
      %s266 = sphi 0, %s252
      %s270 = sphi 0, %s270
      %s272 = sphi 0, %s270
      %s273 = sphi 0, %s272
      %s287 = sphi 0, %s273
      %s291 = sphi 0, %s291
      %s293 = sphi 0, %s291
      %s294 = sphi 0, %s293
      %s308 = sphi 0, %s294
      %s314 = sphi 0, %s316
      %s317 = sphi 0, %s314
      %s318 = sphi 0, %s317
      %s334 = sphi 0, %s318
    $region4: #{mha_forward.1} parent=1 // loop_header_branch
      %24 = sbr.rel (%p22) target = $region8
    $region5: #{mha_forward.1} parent=1 // loop_body
      %s26 = ssub.s32 %s21, 1
      %s27 = ssub.s32 %s21, 2
      %s34 = sadd.s32 1, %s29
      %p35 = scmp.ge.s32.totalorder %s34, 2
      %s36 = scalar_select %p35, 0, %s34
      %s37 = sadd.s32 1, %s28
      %s38 = scalar_select %p35, %s37, %s28
      %p39 = scmp.ge.s32.totalorder %s38, 2
      %s40 = scalar_select %p39, 0, %s38
      %s41 = ssub.s32 %s28, %s40
      %s42 = ssub.s32 %s29, %s36
      %s43 = sor.u32 %s41, %s42
      %p44 = scmp.eq.s32.totalorder %s43, 0
      %s46 = sadd.s32 %s45, 1
      %s47 = scalar_select %p44, %s45, %s46
      %p50 = pneg %p44
      %p51 = scmp.eq.s32.totalorder %s21, 3
      %p52 = por %p50, %p51
      %p53 = scmp.ne.s32.totalorder %s45, %s48
      %p54 = scmp.eq.s32.totalorder %s21, 0
      %p55 = por %p53, %p54
      %p56 = scmp.ne.s32.totalorder %s45, %s48
      %p57 = scmp.eq.s32.totalorder %s26, 3
      %p58 = por %p56, %p57
      %p59 = scmp.ne.s32.totalorder %s48, %s49
      %p60 = scmp.eq.s32.totalorder %s26, 0
      %p61 = por %p59, %p60
      %p62 = scmp.ne.s32.totalorder %s48, %s49
      %p63 = scmp.eq.s32.totalorder %s27, 3
      %p64 = por %p62, %p63
      %p66 = scmp.ne.s32.totalorder %s49, %s65
      %p67 = scmp.eq.s32.totalorder %s27, 0
      %p68 = por %p66, %p67
      %s69 = ssub.s32 %s28, %s40
      %p70 = scmp.eq.s32.totalorder %s69, 0
      %s72 = sadd.s32 %s71, 1
      %s73 = scalar_select %p70, %s71, %s72
      %p76 = pneg %p70
      %p77 = scmp.eq.s32.totalorder %s21, 3
      %p78 = por %p76, %p77
      %p79 = scmp.ne.s32.totalorder %s71, %s74
      %p80 = scmp.eq.s32.totalorder %s21, 0
      %p81 = por %p79, %p80
      %p82 = scmp.ne.s32.totalorder %s71, %s74
      %p83 = scmp.eq.s32.totalorder %s26, 3
      %p84 = por %p82, %p83
      %p85 = scmp.ne.s32.totalorder %s74, %s75
      %p86 = scmp.eq.s32.totalorder %s26, 0
      %p87 = por %p85, %p86
      %p88 = scmp.ne.s32.totalorder %s74, %s75
      %p89 = scmp.eq.s32.totalorder %s27, 3
      %p90 = por %p88, %p89
      %p92 = scmp.ne.s32.totalorder %s75, %s91
      %p93 = scmp.eq.s32.totalorder %s27, 0
      %p94 = por %p92, %p93
      %s95 = ssub.s32 %s28, %s40
      %s96 = ssub.s32 %s29, %s36
      %s97 = sor.u32 %s95, %s96
      %p98 = scmp.eq.s32.totalorder %s97, 0
      %s100 = sadd.s32 %s99, 1
      %s101 = scalar_select %p98, %s99, %s100
      %p104 = pneg %p98
      %p105 = scmp.eq.s32.totalorder %s21, 3
      %p106 = por %p104, %p105
      %p107 = scmp.ne.s32.totalorder %s99, %s102
      %p108 = scmp.eq.s32.totalorder %s21, 0
      %p109 = por %p107, %p108
      %p110 = scmp.ne.s32.totalorder %s99, %s102
      %p111 = scmp.eq.s32.totalorder %s26, 3
      %p112 = por %p110, %p111
      %p113 = scmp.ne.s32.totalorder %s102, %s103
      %p114 = scmp.eq.s32.totalorder %s26, 0
      %p115 = por %p113, %p114
      %p116 = scmp.ne.s32.totalorder %s102, %s103
      %p117 = scmp.eq.s32.totalorder %s27, 3
      %p118 = por %p116, %p117
      %p120 = scmp.ne.s32.totalorder %s103, %s119
      %p121 = scmp.eq.s32.totalorder %s27, 0
      %p122 = por %p120, %p121
      %s124 = sadd.s32 %s123, 1
      %p127 = scmp.eq.s32.totalorder %s21, 3
      %p128 = scmp.ne.s32.totalorder %s123, %s125
      %p129 = scmp.eq.s32.totalorder %s21, 0
      %p130 = por %p128, %p129
      %p131 = scmp.ne.s32.totalorder %s123, %s125
      %p132 = scmp.eq.s32.totalorder %s26, 3
      %p133 = por %p131, %p132
      %p134 = scmp.ne.s32.totalorder %s125, %s126
      %p135 = scmp.eq.s32.totalorder %s26, 0
      %p136 = por %p134, %p135
      %p137 = scmp.ne.s32.totalorder %s125, %s126
      %p138 = scmp.eq.s32.totalorder %s27, 3
      %p139 = por %p137, %p138
      %p141 = scmp.ne.s32.totalorder %s126, %s140
      %p142 = scmp.eq.s32.totalorder %s27, 0
      %p143 = por %p141, %p142
      %s145 = sadd.s32 %s144, 1
      %p148 = scmp.eq.s32.totalorder %s21, 3
      %p149 = scmp.ne.s32.totalorder %s144, %s146
      %p150 = scmp.eq.s32.totalorder %s21, 0
      %p151 = por %p149, %p150
      %p152 = scmp.ne.s32.totalorder %s144, %s146
      %p153 = scmp.eq.s32.totalorder %s26, 3
      %p154 = por %p152, %p153
      %p155 = scmp.ne.s32.totalorder %s146, %s147
      %p156 = scmp.eq.s32.totalorder %s26, 0
      %p157 = por %p155, %p156
      %p158 = scmp.ne.s32.totalorder %s146, %s147
      %p159 = scmp.eq.s32.totalorder %s27, 3
      %p160 = por %p158, %p159
      %p162 = scmp.ne.s32.totalorder %s147, %s161
      %p163 = scmp.eq.s32.totalorder %s27, 0
      %p164 = por %p162, %p163
      %s166 = sadd.s32 %s165, 1
      %p169 = scmp.eq.s32.totalorder %s21, 3
      %p170 = scmp.ne.s32.totalorder %s165, %s167
      %p171 = scmp.eq.s32.totalorder %s21, 0
      %p172 = por %p170, %p171
      %p173 = scmp.ne.s32.totalorder %s165, %s167
      %p174 = scmp.eq.s32.totalorder %s26, 3
      %p175 = por %p173, %p174
      %p176 = scmp.ne.s32.totalorder %s167, %s168
      %p177 = scmp.eq.s32.totalorder %s26, 0
      %p178 = por %p176, %p177
      %p179 = scmp.ne.s32.totalorder %s167, %s168
      %p180 = scmp.eq.s32.totalorder %s27, 3
      %p181 = por %p179, %p180
      %p183 = scmp.ne.s32.totalorder %s168, %s182
      %p184 = scmp.eq.s32.totalorder %s27, 0
      %p185 = por %p183, %p184
      %s187 = sadd.s32 %s186, 1
      %p190 = scmp.eq.s32.totalorder %s21, 3
      %p191 = scmp.ne.s32.totalorder %s186, %s188
      %p192 = scmp.eq.s32.totalorder %s21, 0
      %p193 = por %p191, %p192
      %p194 = scmp.ne.s32.totalorder %s186, %s188
      %p195 = scmp.eq.s32.totalorder %s26, 3
      %p196 = por %p194, %p195
      %p197 = scmp.ne.s32.totalorder %s188, %s189
      %p198 = scmp.eq.s32.totalorder %s26, 0
      %p199 = por %p197, %p198
      %p200 = scmp.ne.s32.totalorder %s188, %s189
      %p201 = scmp.eq.s32.totalorder %s27, 3
      %p202 = por %p200, %p201
      %p204 = scmp.ne.s32.totalorder %s189, %s203
      %p205 = scmp.eq.s32.totalorder %s27, 0
      %p206 = por %p204, %p205
      %s208 = sadd.s32 %s207, 1
      %p211 = scmp.eq.s32.totalorder %s21, 3
      %p212 = scmp.ne.s32.totalorder %s207, %s209
      %p213 = scmp.eq.s32.totalorder %s21, 0
      %p214 = por %p212, %p213
      %p215 = scmp.ne.s32.totalorder %s207, %s209
      %p216 = scmp.eq.s32.totalorder %s26, 3
      %p217 = por %p215, %p216
      %p218 = scmp.ne.s32.totalorder %s209, %s210
      %p219 = scmp.eq.s32.totalorder %s26, 0
      %p220 = por %p218, %p219
      %p221 = scmp.ne.s32.totalorder %s209, %s210
      %p222 = scmp.eq.s32.totalorder %s27, 3
      %p223 = por %p221, %p222
      %p225 = scmp.ne.s32.totalorder %s210, %s224
      %p226 = scmp.eq.s32.totalorder %s27, 0
      %p227 = por %p225, %p226
      %s229 = sadd.s32 %s228, 1
      %p232 = scmp.eq.s32.totalorder %s21, 3
      %p233 = scmp.ne.s32.totalorder %s228, %s230
      %p234 = scmp.eq.s32.totalorder %s21, 0
      %p235 = por %p233, %p234
      %p236 = scmp.ne.s32.totalorder %s228, %s230
      %p237 = scmp.eq.s32.totalorder %s26, 3
      %p238 = por %p236, %p237
      %p239 = scmp.ne.s32.totalorder %s230, %s231
      %p240 = scmp.eq.s32.totalorder %s26, 0
      %p241 = por %p239, %p240
      %p242 = scmp.ne.s32.totalorder %s230, %s231
      %p243 = scmp.eq.s32.totalorder %s27, 3
      %p244 = por %p242, %p243
      %p246 = scmp.ne.s32.totalorder %s231, %s245
      %p247 = scmp.eq.s32.totalorder %s27, 0
      %p248 = por %p246, %p247
      %s250 = sadd.s32 %s249, 1
      %p253 = scmp.eq.s32.totalorder %s21, 3
      %p254 = scmp.ne.s32.totalorder %s249, %s251
      %p255 = scmp.eq.s32.totalorder %s21, 0
      %p256 = por %p254, %p255
      %p257 = scmp.ne.s32.totalorder %s249, %s251
      %p258 = scmp.eq.s32.totalorder %s26, 3
      %p259 = por %p257, %p258
      %p260 = scmp.ne.s32.totalorder %s251, %s252
      %p261 = scmp.eq.s32.totalorder %s26, 0
      %p262 = por %p260, %p261
      %p263 = scmp.ne.s32.totalorder %s251, %s252
      %p264 = scmp.eq.s32.totalorder %s27, 3
      %p265 = por %p263, %p264
      %p267 = scmp.ne.s32.totalorder %s252, %s266
      %p268 = scmp.eq.s32.totalorder %s27, 0
      %p269 = por %p267, %p268
      %s271 = sadd.s32 %s270, 1
      %p274 = scmp.eq.s32.totalorder %s21, 3
      %p275 = scmp.ne.s32.totalorder %s270, %s272
      %p276 = scmp.eq.s32.totalorder %s21, 0
      %p277 = por %p275, %p276
      %p278 = scmp.ne.s32.totalorder %s270, %s272
      %p279 = scmp.eq.s32.totalorder %s26, 3
      %p280 = por %p278, %p279
      %p281 = scmp.ne.s32.totalorder %s272, %s273
      %p282 = scmp.eq.s32.totalorder %s26, 0
      %p283 = por %p281, %p282
      %p284 = scmp.ne.s32.totalorder %s272, %s273
      %p285 = scmp.eq.s32.totalorder %s27, 3
      %p286 = por %p284, %p285
      %p288 = scmp.ne.s32.totalorder %s273, %s287
      %p289 = scmp.eq.s32.totalorder %s27, 0
      %p290 = por %p288, %p289
      %s292 = sadd.s32 %s291, 1
      %p295 = scmp.eq.s32.totalorder %s21, 3
      %p296 = scmp.ne.s32.totalorder %s291, %s293
      %p297 = scmp.eq.s32.totalorder %s21, 0
      %p298 = por %p296, %p297
      %p299 = scmp.ne.s32.totalorder %s291, %s293
      %p300 = scmp.eq.s32.totalorder %s26, 3
      %p301 = por %p299, %p300
      %p302 = scmp.ne.s32.totalorder %s293, %s294
      %p303 = scmp.eq.s32.totalorder %s26, 0
      %p304 = por %p302, %p303
      %p305 = scmp.ne.s32.totalorder %s293, %s294
      %p306 = scmp.eq.s32.totalorder %s27, 3
      %p307 = por %p305, %p306
      %p309 = scmp.ne.s32.totalorder %s294, %s308
      %p310 = scmp.eq.s32.totalorder %s27, 0
      %p311 = por %p309, %p310
      %s312 = ssub.s32 %s28, %s40
      %p313 = scmp.eq.s32.totalorder %s312, 0
      %s315 = sadd.s32 %s314, 1
      %s316 = scalar_select %p313, %s314, %s315
      %p319 = pneg %p313
      %p320 = scmp.eq.s32.totalorder %s21, 3
      %p321 = por %p319, %p320
      %p322 = scmp.ne.s32.totalorder %s314, %s317
      %p323 = scmp.eq.s32.totalorder %s21, 0
      %p324 = por %p322, %p323
      %p325 = scmp.ne.s32.totalorder %s314, %s317
      %p326 = scmp.eq.s32.totalorder %s26, 3
      %p327 = por %p325, %p326
      %p328 = scmp.ne.s32.totalorder %s317, %s318
      %p329 = scmp.eq.s32.totalorder %s26, 0
      %p330 = por %p328, %p329
      %p331 = scmp.ne.s32.totalorder %s317, %s318
      %p332 = scmp.eq.s32.totalorder %s27, 3
      %p333 = por %p331, %p332
      %p335 = scmp.ne.s32.totalorder %s318, %s334
      %p336 = scmp.eq.s32.totalorder %s27, 0
      %p337 = por %p335, %p336
      %p338 = scmp.le.s32.totalorder 1, %s21
      %p339 = scmp.lt.s32.totalorder %s21, 5
      %p340 = pnand %p338, %p339
      %p341 = pneg %p340
      // Predicated region
      $region9: #{mha_forward.1} parent=5 // pred_check
        _
      $region10: #{mha_forward.1} parent=5 // pred_check_branch
        %343 = sbr.rel (%p340) target = $region12
      $region11: #{mha_forward.1} parent=5 // pred_region
        %s344 = ssub.s32 %s21, 1
        // Predicated region
        $region13: #{mha_forward.1} parent=11 // pred_check
          %p345 = pneg %p136
        $region14: #{mha_forward.1} parent=11 // pred_check_branch
          %347 = sbr.rel (%p345) target = $region16
        $region15: #{mha_forward.1} parent=11 // pred_region
          _
        $region16: #{mha_forward.1} parent=11 // pred_fallthru
          _
        // Predicated region
        $region17: #{mha_forward.1} parent=11 // pred_check
          %p348 = pneg %p157
        $region18: #{mha_forward.1} parent=11 // pred_check_branch
          %350 = sbr.rel (%p348) target = $region20
        $region19: #{mha_forward.1} parent=11 // pred_region
          _
        $region20: #{mha_forward.1} parent=11 // pred_fallthru
          _
        // Predicated region
        $region21: #{mha_forward.1} parent=11 // pred_check
          %p351 = pneg %p178
        $region22: #{mha_forward.1} parent=11 // pred_check_branch
          %353 = sbr.rel (%p351) target = $region24
        $region23: #{mha_forward.1} parent=11 // pred_region
          _
        $region24: #{mha_forward.1} parent=11 // pred_fallthru
          _
        // Predicated region
        $region25: #{mha_forward.1} parent=11 // pred_check
          %p354 = pneg %p199
        $region26: #{mha_forward.1} parent=11 // pred_check_branch
          %356 = sbr.rel (%p354) target = $region28
        $region27: #{mha_forward.1} parent=11 // pred_region
          _
        $region28: #{mha_forward.1} parent=11 // pred_fallthru
          _
        // Predicated region
        $region29: #{mha_forward.1} parent=11 // pred_check
          %p357 = pneg %p220
        $region30: #{mha_forward.1} parent=11 // pred_check_branch
          %359 = sbr.rel (%p357) target = $region32
        $region31: #{mha_forward.1} parent=11 // pred_region
          _
        $region32: #{mha_forward.1} parent=11 // pred_fallthru
          _
        // Predicated region
        $region33: #{mha_forward.1} parent=11 // pred_check
          %p360 = pneg %p241
        $region34: #{mha_forward.1} parent=11 // pred_check_branch
          %362 = sbr.rel (%p360) target = $region36
        $region35: #{mha_forward.1} parent=11 // pred_region
          _
        $region36: #{mha_forward.1} parent=11 // pred_fallthru
          _
        // Predicated region
        $region37: #{mha_forward.1} parent=11 // pred_check
          %p363 = pneg %p262
        $region38: #{mha_forward.1} parent=11 // pred_check_branch
          %365 = sbr.rel (%p363) target = $region40
        $region39: #{mha_forward.1} parent=11 // pred_region
          _
        $region40: #{mha_forward.1} parent=11 // pred_fallthru
          _
        // Predicated region
        $region41: #{mha_forward.1} parent=11 // pred_check
          %p366 = pneg %p283
        $region42: #{mha_forward.1} parent=11 // pred_check_branch
          %368 = sbr.rel (%p366) target = $region44
        $region43: #{mha_forward.1} parent=11 // pred_region
          _
        $region44: #{mha_forward.1} parent=11 // pred_fallthru
          _
        // Predicated region
        $region45: #{mha_forward.1} parent=11 // pred_check
          %p369 = pneg %p304
        $region46: #{mha_forward.1} parent=11 // pred_check_branch
          %371 = sbr.rel (%p369) target = $region48
        $region47: #{mha_forward.1} parent=11 // pred_region
          _
        $region48: #{mha_forward.1} parent=11 // pred_fallthru
          _
      $region12: #{mha_forward.1} parent=5 // pred_fallthru
        _
      %p372 = scmp.lt.s32.totalorder %s21, 4
      // Predicated region
      $region49: #{mha_forward.1} parent=5 // pred_check
        %p373 = pneg %p372
      $region50: #{mha_forward.1} parent=5 // pred_check_branch
        %375 = sbr.rel (%p373) target = $region52
      $region51: #{mha_forward.1} parent=5 // pred_region
        // Predicated region
        $region53: #{mha_forward.1} parent=51 // pred_check
          %p376 = pneg %p55
        $region54: #{mha_forward.1} parent=51 // pred_check_branch
          %378 = sbr.rel (%p376) target = $region56
        $region55: #{mha_forward.1} parent=51 // pred_region
          %p379 = scmp.lt.s32.totalorder %s28, 1
          %s380 = scalar_select %p379, %s28, 1
          %p381 = scmp.lt.s32.totalorder %s29, 1
          %s382 = scalar_select %p381, %s29, 1
          %s383 = smul.addr %s380, 2
          %s384 = sadd.s32 %s382, %s383
          %s385 = smul.addr %s384, 8
          %s386 = scalar_lea.vmem %s0, %s385
        $region56: #{mha_forward.1} parent=51 // pred_fallthru
          _
        // Predicated region
        $region57: #{mha_forward.1} parent=51 // pred_check
          %p387 = pneg %p81
        $region58: #{mha_forward.1} parent=51 // pred_check_branch
          %389 = sbr.rel (%p387) target = $region60
        $region59: #{mha_forward.1} parent=51 // pred_region
          %p390 = scmp.lt.s32.totalorder %s28, 1
          %s391 = scalar_select %p390, %s28, 1
          %s392 = smul.addr %s391, 8
          %s393 = scalar_lea.vmem %s1, %s392
        $region60: #{mha_forward.1} parent=51 // pred_fallthru
          _
        // Predicated region
        $region61: #{mha_forward.1} parent=51 // pred_check
          %p394 = pneg %p109
        $region62: #{mha_forward.1} parent=51 // pred_check_branch
          %396 = sbr.rel (%p394) target = $region64
        $region63: #{mha_forward.1} parent=51 // pred_region
          %s397 = smul.u32 8, %s29
          %p398 = scmp.lt.s32.totalorder %s28, 1
          %s399 = scalar_select %p398, %s28, 1
          %p400 = scmp.lt.s32.totalorder %s397, 15
          %s401 = scalar_select %p400, %s397, 15
          %s402 = smul.addr %s399, 16
          %s403 = sadd.s32 %s401, %s402
          %s404 = smul.addr %s403, 8
          %s405 = scalar_lea.vmem %s2, %s404
          %s406 = smul.u32 8, %s29
        $region64: #{mha_forward.1} parent=51 // pred_fallthru
          _
      $region52: #{mha_forward.1} parent=5 // pred_fallthru
        _
      %p407 = scmp.le.s32.totalorder 1, %s21
      %p408 = scmp.lt.s32.totalorder %s21, 5
      %p409 = pnand %p407, %p408
      %p410 = pneg %p409
      // Predicated region
      $region65: #{mha_forward.1} parent=5 // pred_check
        _
      $region66: #{mha_forward.1} parent=5 // pred_check_branch
        %412 = sbr.rel (%p409) target = $region68
      $region67: #{mha_forward.1} parent=5 // pred_region
        %s413 = ssub.s32 %s21, 1
        %p414 = scmp.lt.s32.totalorder %s30, 1
        %s415 = scalar_select %p414, %s30, 1
        %p416 = scmp.lt.s32.totalorder %s31, 1
        %s417 = scalar_select %p416, %s31, 1
        %s418 = smul.addr %s415, 2
        %s419 = sadd.s32 %s417, %s418
        %s420 = smul.addr %s419, 8
        %s421 = scalar_lea.vmem %s0, %s420
        %p422 = pneg %p61
        %p423 = pneg %p58
        %p424 = scmp.lt.s32.totalorder %s30, 1
        %s425 = scalar_select %p424, %s30, 1
        %s426 = smul.addr %s425, 8
        %s427 = scalar_lea.vmem %s1, %s426
        %p428 = pneg %p87
        %p429 = pneg %p84
        %s430 = smul.u32 8, %s31
        %p431 = scmp.lt.s32.totalorder %s30, 1
        %s432 = scalar_select %p431, %s30, 1
        %p433 = scmp.lt.s32.totalorder %s430, 15
        %s434 = scalar_select %p433, %s430, 15
        %s435 = smul.addr %s432, 16
        %s436 = sadd.s32 %s434, %s435
        %s437 = smul.addr %s436, 8
        %s438 = scalar_lea.vmem %s2, %s437
        %p439 = pneg %p115
        %p440 = pneg %p112
        %p441 = pneg %p136
        %p442 = pneg %p133
        %p443 = pneg %p157
        %p444 = pneg %p154
        %p445 = pneg %p178
        %p446 = pneg %p175
        %p447 = pneg %p199
        %p448 = pneg %p196
        %p449 = pneg %p220
        %p450 = pneg %p217
        %p451 = pneg %p241
        %p452 = pneg %p238
        %p453 = pneg %p262
        %p454 = pneg %p259
        %p455 = pneg %p283
        %p456 = pneg %p280
        %p457 = pneg %p304
        %p458 = pneg %p301
        %p459 = pneg %p330
        %p460 = pneg %p327
        %s461 = sand.u32 %s317, 1
        %s462 = scalar_lea.sflag [#allocation6], %s461
        %s463 = sand.u32 %s317, 1
        %s464 = smul.addr %s463, 8
        %s465 = scalar_lea.vmem [#allocation5], %s464
        %p466 = scmp.lt.s32.totalorder %s30, 1
        %s467 = scalar_select %p466, %s30, 1
        %p468 = scmp.lt.s32.totalorder %s31, 1
        %s469 = scalar_select %p468, %s31, 1
        %s470 = smul.addr %s467, 2
        %s471 = sadd.s32 %s469, %s470
        %s472 = smul.addr %s471, 8
        %s473 = scalar_lea.vmem %s0, %s472
        %p474 = scmp.lt.s32.totalorder %s30, 1
        %s475 = scalar_select %p474, %s30, 1
        %s476 = smul.addr %s475, 8
        %s477 = scalar_lea.vmem %s1, %s476
        %s478 = smul.u32 8, %s31
        %p479 = scmp.lt.s32.totalorder %s30, 1
        %s480 = scalar_select %p479, %s30, 1
        %p481 = scmp.lt.s32.totalorder %s478, 15
        %s482 = scalar_select %p481, %s478, 15
        %s483 = smul.addr %s480, 16
        %s484 = sadd.s32 %s482, %s483
        %s485 = smul.addr %s484, 8
        %s486 = scalar_lea.vmem %s2, %s485
        %s487 = smul.u32 8, %s31
        %p488 = scmp.eq.s32.totalorder %s31, 0
        // Predicated region
        $region69: #{mha_forward.1} parent=67 // pred_check
          %p489 = pneg %p488
        $region70: #{mha_forward.1} parent=67 // pred_check_branch
          %491 = sbr.rel (%p489) target = $region72
        $region71: #{mha_forward.1} parent=67 // pred_region
          %vm492 = vcmask 64512
          %493 = vst.msk [vmem:[#allocation2] sm:$0xff] %vm492, -inf
          %494 = vst.msk [vmem:[#allocation3] sm:$0xff] %vm492, 0.0
          %vm495 = vcmask 523264
          %496 = vst.msk [vmem:[#allocation4] sm:$0xff] %vm495, 0.0
        $region72: #{mha_forward.1} parent=67 // pred_fallthru
          _
        %v497 = vld [vmem:[%s473] sm:$0xff]
        %v498 = vld [vmem:[%s477] sm:$0xff]
        %v499 = vld [vmem:[%s486] sm:$0xff]
        %v500 = vld [vmem:[%s486 + $0x8] sm:$0xff]
        %v501 = vld [vmem:[%s486 + $0x10] sm:$0xff]
        %v502 = vld [vmem:[%s486 + $0x18] sm:$0xff]
        %v503 = vld [vmem:[%s486 + $0x20] sm:$0xff]
        %v504 = vld [vmem:[%s486 + $0x28] sm:$0xff]
        %v505 = vld [vmem:[%s486 + $0x30] sm:$0xff]
        %v506 = vld [vmem:[%s486 + $0x38] sm:$0xff]
        %v507 = vld [vmem:[%s3] sm:$0xff]
        %v508 = vld [vmem:[%s3 + $0x8] sm:$0xff]
        %v509 = vld [vmem:[%s3 + $0x10] sm:$0xff]
        %v510 = vld [vmem:[%s3 + $0x18] sm:$0xff]
        %v511 = vld [vmem:[%s3 + $0x20] sm:$0xff]
        %v512 = vld [vmem:[%s3 + $0x28] sm:$0xff]
        %v513 = vld [vmem:[%s3 + $0x30] sm:$0xff]
        %v514 = vld [vmem:[%s3 + $0x38] sm:$0xff]
        %vm515 = vcmask 523264
        %v517 = vsel %vm515, %v497, 0
        %519 = vmatprep.subr.mxu0 0.0
        %520 = vmatpush1.msra.mxu0 %v507
        %521 = vmatprep.subr.mxu0 0.0
        %522 = vmatpush1.msra.mxu0 %v508
        %523 = vmatprep.subr.mxu0 0.0
        %524 = vmatpush1.msra.mxu0 %v509
        %525 = vmatprep.subr.mxu0 0.0
        %526 = vmatpush1.msra.mxu0 %v510
        %527 = vmatprep.subr.mxu0 0.0
        %528 = vmatpush1.msra.mxu0 %v511
        %529 = vmatprep.subr.mxu0 0.0
        %530 = vmatpush1.msra.mxu0 %v512
        %531 = vmatprep.subr.mxu0 0.0
        %532 = vmatpush1.msra.mxu0 %v513
        %533 = vmatprep.subr.mxu0 0.0
        %534 = vmatpush1.msra.mxu0 %v514
        %535 = vmatprep.subr.mxu0 0.0
        %536 = vmatpush1.msra.mxu0 0.0
        %537 = vmatprep.subr.mxu0 0.0
        %538 = vmatpush1.msra.mxu0 0.0
        %539 = vmatprep.subr.mxu0 0.0
        %540 = vmatpush1.msra.mxu0 0.0
        %541 = vmatprep.subr.mxu0 0.0
        %542 = vmatpush1.msra.mxu0 0.0
        %543 = vmatprep.subr.mxu0 0.0
        %544 = vmatpush1.msra.mxu0 0.0
        %545 = vmatprep.subr.mxu0 0.0
        %546 = vmatpush1.msra.mxu0 0.0
        %547 = vmatprep.subr.mxu0 0.0
        %548 = vmatpush1.msra.mxu0 0.0
        %549 = vmatprep.subr.mxu0 0.0
        %550 = vmatpush1.msra.mxu0 0.0
        %551 = vmatprep.subr.mxu0 0.0
        %552 = vmatpush1.msra.mxu0 0.0
        %553 = vmatprep.subr.mxu0 0.0
        %554 = vmatpush1.msra.mxu0 0.0
        %555 = vmatprep.subr.mxu0 0.0
        %556 = vmatpush1.msra.mxu0 0.0
        %557 = vmatprep.subr.mxu0 0.0
        %558 = vmatpush1.msra.mxu0 0.0
        %559 = vmatprep.subr.mxu0 0.0
        %560 = vmatpush1.msra.mxu0 0.0
        %561 = vmatprep.subr.mxu0 0.0
        %562 = vmatpush1.msra.mxu0 0.0
        %563 = vmatprep.subr.mxu0 0.0
        %564 = vmatpush1.msra.mxu0 0.0
        %565 = vmatprep.subr.mxu0 0.0
        %566 = vmatpush1.msra.mxu0 0.0
        %567 = vmatprep.subr.mxu0 0.0
        %568 = vmatpush1.msra.mxu0 0.0
        %569 = vmatprep.subr.mxu0 0.0
        %570 = vmatpush1.msra.mxu0 0.0
        %571 = vmatprep.subr.mxu0 0.0
        %572 = vmatpush1.msra.mxu0 0.0
        %573 = vmatprep.subr.mxu0 0.0
        %574 = vmatpush1.msra.mxu0 0.0
        %575 = vmatprep.subr.mxu0 0.0
        %576 = vmatpush1.msra.mxu0 0.0
        %577 = vmatprep.subr.mxu0 0.0
        %578 = vmatpush1.msra.mxu0 0.0
        %579 = vmatprep.subr.mxu0 0.0
        %580 = vmatpush1.msra.mxu0 0.0
        %581 = vmatprep.subr.mxu0 0.0
        %582 = vmatpush1.msra.mxu0 0.0
        %583 = vmatprep.mubr.f32.mxu0 0.0
        %584 = vmatmul.mubr.f32.gmra.mrb[0].mxu0 %v517
        %v585 = vpop.f32.mrb[0].mxu0
        %v586 = vadd.f32 0.0, %v585
        %v587 = vpop.f32.mrb[0].mxu0
        %588 = vdwg.mxu0
        %v589 = vld [vmem:[%s7] sm:$0x1]
        %v591 = vlaneseq
        %v592 = vshrl.u32 %v591, 7
        %v593 = vsub.s32 0, %v592
        %v594 = vrot.slane %v589, %v593
        %v596 = vadd.f32 %v586, %v594
        %v597 = vld [vmem:[%s4] sm:$0xff]
        %v598 = vld [vmem:[%s4 + $0x8] sm:$0xff]
        %v599 = vld [vmem:[%s4 + $0x10] sm:$0xff]
        %v600 = vld [vmem:[%s4 + $0x18] sm:$0xff]
        %v601 = vld [vmem:[%s4 + $0x20] sm:$0xff]
        %v602 = vld [vmem:[%s4 + $0x28] sm:$0xff]
        %v603 = vld [vmem:[%s4 + $0x30] sm:$0xff]
        %v604 = vld [vmem:[%s4 + $0x38] sm:$0xff]
        %v605 = vld [vmem:[%s8] sm:$0x1]
        %v607 = vlaneseq
        %v608 = vshrl.u32 %v607, 7
        %v609 = vsub.s32 0, %v608
        %v610 = vrot.slane %v605, %v609
        %v613 = vsel %vm515, %v498, 0
        %615 = vmatprep.subr.mxu0 0.0
        %616 = vmatpush1.msra.mxu0 %v597
        %617 = vmatprep.subr.mxu0 0.0
        %618 = vmatpush1.msra.mxu0 %v598
        %619 = vmatprep.subr.mxu0 0.0
        %620 = vmatpush1.msra.mxu0 %v599
        %621 = vmatprep.subr.mxu0 0.0
        %622 = vmatpush1.msra.mxu0 %v600
        %623 = vmatprep.subr.mxu0 0.0
        %624 = vmatpush1.msra.mxu0 %v601
        %625 = vmatprep.subr.mxu0 0.0
        %626 = vmatpush1.msra.mxu0 %v602
        %627 = vmatprep.subr.mxu0 0.0
        %628 = vmatpush1.msra.mxu0 %v603
        %629 = vmatprep.subr.mxu0 0.0
        %630 = vmatpush1.msra.mxu0 %v604
        %631 = vmatprep.subr.mxu0 0.0
        %632 = vmatpush1.msra.mxu0 0.0
        %633 = vmatprep.subr.mxu0 0.0
        %634 = vmatpush1.msra.mxu0 0.0
        %635 = vmatprep.subr.mxu0 0.0
        %636 = vmatpush1.msra.mxu0 0.0
        %637 = vmatprep.subr.mxu0 0.0
        %638 = vmatpush1.msra.mxu0 0.0
        %639 = vmatprep.subr.mxu0 0.0
        %640 = vmatpush1.msra.mxu0 0.0
        %641 = vmatprep.subr.mxu0 0.0
        %642 = vmatpush1.msra.mxu0 0.0
        %643 = vmatprep.subr.mxu0 0.0
        %644 = vmatpush1.msra.mxu0 0.0
        %645 = vmatprep.subr.mxu0 0.0
        %646 = vmatpush1.msra.mxu0 0.0
        %647 = vmatprep.subr.mxu0 0.0
        %648 = vmatpush1.msra.mxu0 0.0
        %649 = vmatprep.subr.mxu0 0.0
        %650 = vmatpush1.msra.mxu0 0.0
        %651 = vmatprep.subr.mxu0 0.0
        %652 = vmatpush1.msra.mxu0 0.0
        %653 = vmatprep.subr.mxu0 0.0
        %654 = vmatpush1.msra.mxu0 0.0
        %655 = vmatprep.subr.mxu0 0.0
        %656 = vmatpush1.msra.mxu0 0.0
        %657 = vmatprep.subr.mxu0 0.0
        %658 = vmatpush1.msra.mxu0 0.0
        %659 = vmatprep.subr.mxu0 0.0
        %660 = vmatpush1.msra.mxu0 0.0
        %661 = vmatprep.subr.mxu0 0.0
        %662 = vmatpush1.msra.mxu0 0.0
        %663 = vmatprep.subr.mxu0 0.0
        %664 = vmatpush1.msra.mxu0 0.0
        %665 = vmatprep.subr.mxu0 0.0
        %666 = vmatpush1.msra.mxu0 0.0
        %667 = vmatprep.subr.mxu0 0.0
        %668 = vmatpush1.msra.mxu0 0.0
        %669 = vmatprep.subr.mxu0 0.0
        %670 = vmatpush1.msra.mxu0 0.0
        %671 = vmatprep.subr.mxu0 0.0
        %672 = vmatpush1.msra.mxu0 0.0
        %673 = vmatprep.subr.mxu0 0.0
        %674 = vmatpush1.msra.mxu0 0.0
        %675 = vmatprep.subr.mxu0 0.0
        %676 = vmatpush1.msra.mxu0 0.0
        %677 = vmatprep.subr.mxu0 0.0
        %678 = vmatpush1.msra.mxu0 0.0
        %679 = vmatprep.mubr.f32.mxu0 0.0
        %680 = vmatmul.mubr.f32.gmra.mrb[0].mxu0 %v613
        %v681 = vpop.f32.mrb[0].mxu0
        %v682 = vadd.f32 %v610, %v681
        %v683 = vpop.f32.mrb[0].mxu0
        %684 = vdwg.mxu0
        %v685 = vld [vmem:[%s5] sm:$0xff]
        %v686 = vld [vmem:[%s5 + $0x8] sm:$0xff]
        %v687 = vld [vmem:[%s5 + $0x10] sm:$0xff]
        %v688 = vld [vmem:[%s5 + $0x18] sm:$0xff]
        %v689 = vld [vmem:[%s5 + $0x20] sm:$0xff]
        %v690 = vld [vmem:[%s5 + $0x28] sm:$0xff]
        %v691 = vld [vmem:[%s5 + $0x30] sm:$0xff]
        %v692 = vld [vmem:[%s5 + $0x38] sm:$0xff]
        %v694 = vsel %vm515, %v499, 0
        %v697 = vsel %vm515, %v500, 0
        %v700 = vsel %vm515, %v501, 0
        %v703 = vsel %vm515, %v502, 0
        %v706 = vsel %vm515, %v503, 0
        %v709 = vsel %vm515, %v504, 0
        %v712 = vsel %vm515, %v505, 0
        %v715 = vsel %vm515, %v506, 0
        %717 = vmatprep.subr.mxu0 0.0
        %718 = vmatpush1.msra.mxu0 %v685
        %719 = vmatprep.subr.mxu0 0.0
        %720 = vmatpush1.msra.mxu0 %v686
        %721 = vmatprep.subr.mxu0 0.0
        %722 = vmatpush1.msra.mxu0 %v687
        %723 = vmatprep.subr.mxu0 0.0
        %724 = vmatpush1.msra.mxu0 %v688
        %725 = vmatprep.subr.mxu0 0.0
        %726 = vmatpush1.msra.mxu0 %v689
        %727 = vmatprep.subr.mxu0 0.0
        %728 = vmatpush1.msra.mxu0 %v690
        %729 = vmatprep.subr.mxu0 0.0
        %730 = vmatpush1.msra.mxu0 %v691
        %731 = vmatprep.subr.mxu0 0.0
        %732 = vmatpush1.msra.mxu0 %v692
        %733 = vmatprep.subr.mxu0 0.0
        %734 = vmatpush1.msra.mxu0 0.0
        %735 = vmatprep.subr.mxu0 0.0
        %736 = vmatpush1.msra.mxu0 0.0
        %737 = vmatprep.subr.mxu0 0.0
        %738 = vmatpush1.msra.mxu0 0.0
        %739 = vmatprep.subr.mxu0 0.0
        %740 = vmatpush1.msra.mxu0 0.0
        %741 = vmatprep.subr.mxu0 0.0
        %742 = vmatpush1.msra.mxu0 0.0
        %743 = vmatprep.subr.mxu0 0.0
        %744 = vmatpush1.msra.mxu0 0.0
        %745 = vmatprep.subr.mxu0 0.0
        %746 = vmatpush1.msra.mxu0 0.0
        %747 = vmatprep.subr.mxu0 0.0
        %748 = vmatpush1.msra.mxu0 0.0
        %749 = vmatprep.subr.mxu0 0.0
        %750 = vmatpush1.msra.mxu0 0.0
        %751 = vmatprep.subr.mxu0 0.0
        %752 = vmatpush1.msra.mxu0 0.0
        %753 = vmatprep.subr.mxu0 0.0
        %754 = vmatpush1.msra.mxu0 0.0
        %755 = vmatprep.subr.mxu0 0.0
        %756 = vmatpush1.msra.mxu0 0.0
        %757 = vmatprep.subr.mxu0 0.0
        %758 = vmatpush1.msra.mxu0 0.0
        %759 = vmatprep.subr.mxu0 0.0
        %760 = vmatpush1.msra.mxu0 0.0
        %761 = vmatprep.subr.mxu0 0.0
        %762 = vmatpush1.msra.mxu0 0.0
        %763 = vmatprep.subr.mxu0 0.0
        %764 = vmatpush1.msra.mxu0 0.0
        %765 = vmatprep.subr.mxu0 0.0
        %766 = vmatpush1.msra.mxu0 0.0
        %767 = vmatprep.subr.mxu0 0.0
        %768 = vmatpush1.msra.mxu0 0.0
        %769 = vmatprep.subr.mxu0 0.0
        %770 = vmatpush1.msra.mxu0 0.0
        %771 = vmatprep.subr.mxu0 0.0
        %772 = vmatpush1.msra.mxu0 0.0
        %773 = vmatprep.subr.mxu0 0.0
        %774 = vmatpush1.msra.mxu0 0.0
        %775 = vmatprep.subr.mxu0 0.0
        %776 = vmatpush1.msra.mxu0 0.0
        %777 = vmatprep.subr.mxu0 0.0
        %778 = vmatpush1.msra.mxu0 0.0
        %779 = vmatprep.subr.mxu0 0.0
        %780 = vmatpush1.msra.mxu0 0.0
        %781 = vmatprep.mubr.f32.mxu0 0.0
        %782 = vmatmul.mubr.f32.gmra.mrb[0].mxu0 %v694
        %v783 = vpop.f32.mrb[0].mxu0
        %v784 = vadd.f32 0.0, %v783
        %v785 = vpop.f32.mrb[0].mxu0
        %786 = vmatprep.mubr.f32.mxu0 0.0
        %787 = vmatmul.mubr.f32.gmra.mrb[0].mxu0 %v697
        %v788 = vpop.f32.mrb[0].mxu0
        %v789 = vadd.f32 0.0, %v788
        %v790 = vpop.f32.mrb[0].mxu0
        %791 = vmatprep.mubr.f32.mxu0 0.0
        %792 = vmatmul.mubr.f32.gmra.mrb[0].mxu0 %v700
        %v793 = vpop.f32.mrb[0].mxu0
        %v794 = vadd.f32 0.0, %v793
        %v795 = vpop.f32.mrb[0].mxu0
        %796 = vmatprep.mubr.f32.mxu0 0.0
        %797 = vmatmul.mubr.f32.gmra.mrb[0].mxu0 %v703
        %v798 = vpop.f32.mrb[0].mxu0
        %v799 = vadd.f32 0.0, %v798
        %v800 = vpop.f32.mrb[0].mxu0
        %801 = vmatprep.mubr.f32.mxu0 0.0
        %802 = vmatmul.mubr.f32.gmra.mrb[0].mxu0 %v706
        %v803 = vpop.f32.mrb[0].mxu0
        %v804 = vadd.f32 0.0, %v803
        %v805 = vpop.f32.mrb[0].mxu0
        %806 = vmatprep.mubr.f32.mxu0 0.0
        %807 = vmatmul.mubr.f32.gmra.mrb[0].mxu0 %v709
        %v808 = vpop.f32.mrb[0].mxu0
        %v809 = vadd.f32 0.0, %v808
        %v810 = vpop.f32.mrb[0].mxu0
        %811 = vmatprep.mubr.f32.mxu0 0.0
        %812 = vmatmul.mubr.f32.gmra.mrb[0].mxu0 %v712
        %v813 = vpop.f32.mrb[0].mxu0
        %v814 = vadd.f32 0.0, %v813
        %v815 = vpop.f32.mrb[0].mxu0
        %816 = vmatprep.mubr.f32.mxu0 0.0
        %817 = vmatmul.mubr.f32.gmra.mrb[0].mxu0 %v715
        %v818 = vpop.f32.mrb[0].mxu0
        %v819 = vadd.f32 0.0, %v818
        %v820 = vpop.f32.mrb[0].mxu0
        %821 = vdwg.mxu0
        %v823 = vcombine.high %v596, %v596
        %v825 = vunpack.c.l.s4 1966171168
        %v826 = vunpack.c.0.s8 %v825
        %v827 = vlaneseq
        %v828 = vshrl.u32 %v827, 7
        %v829 = vsub.s32 %v826, %v828
        %v830 = vrot.slane %v596, %v829
        %v832 = vunpack.c.l.s4 1966171168
        %v833 = vunpack.c.0.s8 %v832
        %v834 = vlaneseq
        %v835 = vshrl.u32 %v834, 7
        %v836 = vsub.s32 %v833, %v835
        %v837 = vrot.slane %v823, %v836
        %v838 = vcombine.high %v830, %v830
        %v839 = vcombine.high %v837, %v837
        %v841 = vunpack.c.l.s4 1966171168
        %v842 = vunpack.c.0.s8 %v841
        %v843 = vlaneseq
        %v844 = vshrl.u32 %v843, 7
        %v845 = vsub.s32 %v842, %v844
        %v846 = vrot.slane %v830, %v845
        %v848 = vunpack.c.l.s4 1966171168
        %v849 = vunpack.c.0.s8 %v848
        %v850 = vlaneseq
        %v851 = vshrl.u32 %v850, 7
        %v852 = vsub.s32 %v849, %v851
        %v853 = vrot.slane %v837, %v852
        %v855 = vunpack.c.l.s4 1966171168
        %v856 = vunpack.c.0.s8 %v855
        %v857 = vlaneseq
        %v858 = vshrl.u32 %v857, 7
        %v859 = vsub.s32 %v856, %v858
        %v860 = vrot.slane %v838, %v859
        %v862 = vunpack.c.l.s4 1966171168
        %v863 = vunpack.c.0.s8 %v862
        %v864 = vlaneseq
        %v865 = vshrl.u32 %v864, 7
        %v866 = vsub.s32 %v863, %v865
        %v867 = vrot.slane %v839, %v866
        %v868 = vcombine.high %v846, %v846
        %v869 = vcombine.high %v853, %v853
        %v870 = vcombine.high %v860, %v860
        %v871 = vcombine.high %v867, %v867
        %v872 = vlaneseq
        %v873 = vshrl.u32 %v872, 7
        %v874 = vsub.s32 0, %v873
        %v875 = vrot.slane %v846, %v874
        %v876 = vlaneseq
        %v877 = vshrl.u32 %v876, 7
        %v878 = vsub.s32 0, %v877
        %v879 = vrot.slane %v860, %v878
        %v880 = vlaneseq
        %v881 = vshrl.u32 %v880, 7
        %v882 = vsub.s32 0, %v881
        %v883 = vrot.slane %v868, %v882
        %v884 = vlaneseq
        %v885 = vshrl.u32 %v884, 7
        %v886 = vsub.s32 0, %v885
        %v887 = vrot.slane %v870, %v886
        %v888 = vlaneseq
        %v889 = vshrl.u32 %v888, 7
        %v890 = vsub.s32 0, %v889
        %v891 = vrot.slane %v853, %v890
        %v892 = vlaneseq
        %v893 = vshrl.u32 %v892, 7
        %v894 = vsub.s32 0, %v893
        %v895 = vrot.slane %v867, %v894
        %v896 = vlaneseq
        %v897 = vshrl.u32 %v896, 7
        %v898 = vsub.s32 0, %v897
        %v899 = vrot.slane %v869, %v898
        %v900 = vlaneseq
        %v901 = vshrl.u32 %v900, 7
        %v902 = vsub.s32 0, %v901
        %v903 = vrot.slane %v871, %v902
        %v912 = vadd.f32 %v784, %v875
        %v913 = vadd.f32 %v789, %v879
        %v914 = vadd.f32 %v794, %v883
        %v915 = vadd.f32 %v799, %v887
        %v916 = vadd.f32 %v804, %v891
        %v917 = vadd.f32 %v809, %v895
        %v918 = vadd.f32 %v814, %v899
        %v919 = vadd.f32 %v819, %v903
        %921 = vrot.lane.b32.xlu0 %v682, 64
        %v922 = vpop.permute.xlu0 %921
        %v924 = vadd.f32 %v784, %v922
        %v925 = vadd.f32 %v789, %v922
        %v926 = vadd.f32 %v794, %v922
        %v927 = vadd.f32 %v799, %v922
        %v928 = vadd.f32 %v804, %v922
        %v929 = vadd.f32 %v809, %v922
        %v930 = vadd.f32 %v814, %v922
        %v931 = vadd.f32 %v819, %v922
        %940 = vrot.lane.b32.xlu0 %v924, 64
        %v941 = vpop.permute.xlu0 %940
        %942 = vrot.lane.b32.xlu0 %v925, 64
        %v943 = vpop.permute.xlu0 %942
        %944 = vrot.lane.b32.xlu0 %v926, 64
        %v945 = vpop.permute.xlu0 %944
        %946 = vrot.lane.b32.xlu0 %v927, 64
        %v947 = vpop.permute.xlu0 %946
        %948 = vrot.lane.b32.xlu0 %v928, 64
        %v949 = vpop.permute.xlu0 %948
        %950 = vrot.lane.b32.xlu0 %v929, 64
        %v951 = vpop.permute.xlu0 %950
        %952 = vrot.lane.b32.xlu0 %v930, 64
        %v953 = vpop.permute.xlu0 %952
        %954 = vrot.lane.b32.xlu0 %v931, 64
        %v955 = vpop.permute.xlu0 %954
        %v964 = vmul.f32 %v912, %v941
        %v965 = vmul.f32 %v913, %v943
        %v966 = vmul.f32 %v914, %v945
        %v967 = vmul.f32 %v915, %v947
        %v968 = vmul.f32 %v916, %v949
        %v969 = vmul.f32 %v917, %v951
        %v970 = vmul.f32 %v918, %v953
        %v971 = vmul.f32 %v919, %v955
        %v972 = vld [vmem:[%s10] sm:$0xff]
        %v973 = vld [vmem:[%s10 + $0x8] sm:$0xff]
        %v974 = vld [vmem:[%s10 + $0x10] sm:$0xff]
        %v975 = vld [vmem:[%s10 + $0x18] sm:$0xff]
        %v976 = vld [vmem:[%s10 + $0x20] sm:$0xff]
        %v977 = vld [vmem:[%s10 + $0x28] sm:$0xff]
        %v978 = vld [vmem:[%s10 + $0x30] sm:$0xff]
        %v979 = vld [vmem:[%s10 + $0x38] sm:$0xff]
        %v981 = vsel %vm515, %v964, 0
        %v984 = vsel %vm515, %v965, 0
        %v987 = vsel %vm515, %v966, 0
        %v990 = vsel %vm515, %v967, 0
        %v993 = vsel %vm515, %v968, 0
        %v996 = vsel %vm515, %v969, 0
        %v999 = vsel %vm515, %v970, 0
        %v1002 = vsel %vm515, %v971, 0
        %1004 = vmatprep.subr.mxu0 0.0
        %1005 = vmatpush1.msra.mxu0 %v972
        %1006 = vmatprep.subr.mxu0 0.0
        %1007 = vmatpush1.msra.mxu0 %v973
        %1008 = vmatprep.subr.mxu0 0.0
        %1009 = vmatpush1.msra.mxu0 %v974
        %1010 = vmatprep.subr.mxu0 0.0
        %1011 = vmatpush1.msra.mxu0 %v975
        %1012 = vmatprep.subr.mxu0 0.0
        %1013 = vmatpush1.msra.mxu0 %v976
        %1014 = vmatprep.subr.mxu0 0.0
        %1015 = vmatpush1.msra.mxu0 %v977
        %1016 = vmatprep.subr.mxu0 0.0
        %1017 = vmatpush1.msra.mxu0 %v978
        %1018 = vmatprep.subr.mxu0 0.0
        %1019 = vmatpush1.msra.mxu0 %v979
        %1020 = vmatprep.subr.mxu0 0.0
        %1021 = vmatpush1.msra.mxu0 0.0
        %1022 = vmatprep.subr.mxu0 0.0
        %1023 = vmatpush1.msra.mxu0 0.0
        %1024 = vmatprep.subr.mxu0 0.0
        %1025 = vmatpush1.msra.mxu0 0.0
        %1026 = vmatprep.subr.mxu0 0.0
        %1027 = vmatpush1.msra.mxu0 0.0
        %1028 = vmatprep.subr.mxu0 0.0
        %1029 = vmatpush1.msra.mxu0 0.0
        %1030 = vmatprep.subr.mxu0 0.0
        %1031 = vmatpush1.msra.mxu0 0.0
        %1032 = vmatprep.subr.mxu0 0.0
        %1033 = vmatpush1.msra.mxu0 0.0
        %1034 = vmatprep.subr.mxu0 0.0
        %1035 = vmatpush1.msra.mxu0 0.0
        %1036 = vmatprep.subr.mxu0 0.0
        %1037 = vmatpush1.msra.mxu0 0.0
        %1038 = vmatprep.subr.mxu0 0.0
        %1039 = vmatpush1.msra.mxu0 0.0
        %1040 = vmatprep.subr.mxu0 0.0
        %1041 = vmatpush1.msra.mxu0 0.0
        %1042 = vmatprep.subr.mxu0 0.0
        %1043 = vmatpush1.msra.mxu0 0.0
        %1044 = vmatprep.subr.mxu0 0.0
        %1045 = vmatpush1.msra.mxu0 0.0
        %1046 = vmatprep.subr.mxu0 0.0
        %1047 = vmatpush1.msra.mxu0 0.0
        %1048 = vmatprep.subr.mxu0 0.0
        %1049 = vmatpush1.msra.mxu0 0.0
        %1050 = vmatprep.subr.mxu0 0.0
        %1051 = vmatpush1.msra.mxu0 0.0
        %1052 = vmatprep.subr.mxu0 0.0
        %1053 = vmatpush1.msra.mxu0 0.0
        %1054 = vmatprep.subr.mxu0 0.0
        %1055 = vmatpush1.msra.mxu0 0.0
        %1056 = vmatprep.subr.mxu0 0.0
        %1057 = vmatpush1.msra.mxu0 0.0
        %1058 = vmatprep.subr.mxu0 0.0
        %1059 = vmatpush1.msra.mxu0 0.0
        %1060 = vmatprep.subr.mxu0 0.0
        %1061 = vmatpush1.msra.mxu0 0.0
        %1062 = vmatprep.subr.mxu0 0.0
        %1063 = vmatpush1.msra.mxu0 0.0
        %1064 = vmatprep.subr.mxu0 0.0
        %1065 = vmatpush1.msra.mxu0 0.0
        %1066 = vmatprep.subr.mxu0 0.0
        %1067 = vmatpush1.msra.mxu0 0.0
        %1068 = vmatprep.mubr.f32.mxu0 0.0
        %1069 = vmatmul.mubr.f32.gmra.mrb[0].mxu0 %v981
        %v1070 = vpop.f32.mrb[0].mxu0
        %v1071 = vadd.f32 0.0, %v1070
        %v1072 = vpop.f32.mrb[0].mxu0
        %1073 = vmatprep.mubr.f32.mxu0 0.0
        %1074 = vmatmul.mubr.f32.gmra.mrb[0].mxu0 %v984
        %v1075 = vpop.f32.mrb[0].mxu0
        %v1076 = vadd.f32 0.0, %v1075
        %v1077 = vpop.f32.mrb[0].mxu0
        %1078 = vmatprep.mubr.f32.mxu0 0.0
        %1079 = vmatmul.mubr.f32.gmra.mrb[0].mxu0 %v987
        %v1080 = vpop.f32.mrb[0].mxu0
        %v1081 = vadd.f32 0.0, %v1080
        %v1082 = vpop.f32.mrb[0].mxu0
        %1083 = vmatprep.mubr.f32.mxu0 0.0
        %1084 = vmatmul.mubr.f32.gmra.mrb[0].mxu0 %v990
        %v1085 = vpop.f32.mrb[0].mxu0
        %v1086 = vadd.f32 0.0, %v1085
        %v1087 = vpop.f32.mrb[0].mxu0
        %1088 = vmatprep.mubr.f32.mxu0 0.0
        %1089 = vmatmul.mubr.f32.gmra.mrb[0].mxu0 %v993
        %v1090 = vpop.f32.mrb[0].mxu0
        %v1091 = vadd.f32 0.0, %v1090
        %v1092 = vpop.f32.mrb[0].mxu0
        %1093 = vmatprep.mubr.f32.mxu0 0.0
        %1094 = vmatmul.mubr.f32.gmra.mrb[0].mxu0 %v996
        %v1095 = vpop.f32.mrb[0].mxu0
        %v1096 = vadd.f32 0.0, %v1095
        %v1097 = vpop.f32.mrb[0].mxu0
        %1098 = vmatprep.mubr.f32.mxu0 0.0
        %1099 = vmatmul.mubr.f32.gmra.mrb[0].mxu0 %v999
        %v1100 = vpop.f32.mrb[0].mxu0
        %v1101 = vadd.f32 0.0, %v1100
        %v1102 = vpop.f32.mrb[0].mxu0
        %1103 = vmatprep.mubr.f32.mxu0 0.0
        %1104 = vmatmul.mubr.f32.gmra.mrb[0].mxu0 %v1002
        %v1105 = vpop.f32.mrb[0].mxu0
        %v1106 = vadd.f32 0.0, %v1105
        %v1107 = vpop.f32.mrb[0].mxu0
        %1108 = vdwg.mxu0
        %v1109 = vmul.f32 %v1071, 0.35355338
        %v1110 = vmul.f32 %v1076, 0.35355338
        %v1111 = vmul.f32 %v1081, 0.35355338
        %v1112 = vmul.f32 %v1086, 0.35355338
        %v1113 = vmul.f32 %v1091, 0.35355338
        %v1114 = vmul.f32 %v1096, 0.35355338
        %v1115 = vmul.f32 %v1101, 0.35355338
        %v1116 = vmul.f32 %v1106, 0.35355338
        %v1117 = vld [vmem:[#allocation2] sm:$0xff]
        %vm1118 = vcmask 64512
        %v1119 = vsel %vm1118, %v1109, -inf
        %v1120 = vsel %vm1118, %v1110, -inf
        %v1121 = vsel %vm1118, %v1111, -inf
        %v1122 = vsel %vm1118, %v1112, -inf
        %v1123 = vsel %vm1118, %v1113, -inf
        %v1124 = vmax.f32 %v1119, %v1123
        %v1125 = vsel %vm1118, %v1114, -inf
        %v1126 = vmax.f32 %v1120, %v1125
        %v1127 = vsel %vm1118, %v1115, -inf
        %v1128 = vmax.f32 %v1121, %v1127
        %v1129 = vsel %vm1118, %v1116, -inf
        %v1130 = vmax.f32 %v1122, %v1129
        %v1131 = vmax.f32 %v1124, %v1126
        %v1132 = vmax.f32 %v1128, %v1130
        %v1133 = vmax.f32 %v1131, %v1132
        %v1134 = vmax.f32 %v1117, %v1133
        %v1135 = vsub.f32 %v1117, %v1134
        %v1136 = vmul.f32 %v1135, 1.442695
        %v1137 = vpow.pop %v1136
        %v1138 = vsub.f32 %v1109, %v1134
        %v1139 = vsub.f32 %v1110, %v1134
        %v1140 = vsub.f32 %v1111, %v1134
        %v1141 = vsub.f32 %v1112, %v1134
        %v1142 = vsub.f32 %v1113, %v1134
        %v1143 = vsub.f32 %v1114, %v1134
        %v1144 = vsub.f32 %v1115, %v1134
        %v1145 = vsub.f32 %v1116, %v1134
        %v1146 = vmul.f32 %v1138, 1.442695
        %v1147 = vpow.pop %v1146
        %v1148 = vmul.f32 %v1139, 1.442695
        %v1149 = vpow.pop %v1148
        %v1150 = vmul.f32 %v1140, 1.442695
        %v1151 = vpow.pop %v1150
        %v1152 = vmul.f32 %v1141, 1.442695
        %v1153 = vpow.pop %v1152
        %v1154 = vmul.f32 %v1142, 1.442695
        %v1155 = vpow.pop %v1154
        %v1156 = vmul.f32 %v1143, 1.442695
        %v1157 = vpow.pop %v1156
        %v1158 = vmul.f32 %v1144, 1.442695
        %v1159 = vpow.pop %v1158
        %v1160 = vmul.f32 %v1145, 1.442695
        %v1161 = vpow.pop %v1160
        %v1162 = vld [vmem:[#allocation3] sm:$0xff]
        %v1163 = vmul.f32 %v1137, %v1162
        %v1164 = vsel %vm1118, %v1147, 0.0
        %v1165 = vsel %vm1118, %v1149, 0.0
        %v1166 = vadd.f32 %v1164, %v1165
        %v1167 = vsel %vm1118, %v1151, 0.0
        %v1168 = vadd.f32 %v1166, %v1167
        %v1169 = vsel %vm1118, %v1153, 0.0
        %v1170 = vadd.f32 %v1168, %v1169
        %v1171 = vsel %vm1118, %v1155, 0.0
        %v1172 = vadd.f32 %v1170, %v1171
        %v1173 = vsel %vm1118, %v1157, 0.0
        %v1174 = vadd.f32 %v1172, %v1173
        %v1175 = vsel %vm1118, %v1159, 0.0
        %v1176 = vadd.f32 %v1174, %v1175
        %v1177 = vsel %vm1118, %v1161, 0.0
        %v1178 = vadd.f32 %v1176, %v1177
        %v1179 = vadd.f32 %v1163, %v1178
        %1180 = vst.msk [vmem:[#allocation3] sm:$0xff] %vm1118, %v1179
        %1181 = vst.msk [vmem:[#allocation2] sm:$0xff] %vm1118, %v1134
        %v1182 = vld [vmem:[%s11] sm:$0xff]
        %v1184 = vsel %vm1118, %v1147, 0
        %v1187 = vsel %vm1118, %v1149, 0
        %v1190 = vsel %vm1118, %v1151, 0
        %v1193 = vsel %vm1118, %v1153, 0
        %v1196 = vsel %vm1118, %v1155, 0
        %v1199 = vsel %vm1118, %v1157, 0
        %v1202 = vsel %vm1118, %v1159, 0
        %v1205 = vsel %vm1118, %v1161, 0
        %1207 = vmatprep.subr.mxu0 0.0
        %1208 = vmatpush1.msra.mxu0 %v1182
        %1209 = vmatprep.subr.mxu0 0.0
        %1210 = vmatpush1.msra.mxu0 0.0
        %1211 = vmatprep.subr.mxu0 0.0
        %1212 = vmatpush1.msra.mxu0 0.0
        %1213 = vmatprep.subr.mxu0 0.0
        %1214 = vmatpush1.msra.mxu0 0.0
        %1215 = vmatprep.subr.mxu0 0.0
        %1216 = vmatpush1.msra.mxu0 0.0
        %1217 = vmatprep.subr.mxu0 0.0
        %1218 = vmatpush1.msra.mxu0 0.0
        %1219 = vmatprep.subr.mxu0 0.0
        %1220 = vmatpush1.msra.mxu0 0.0
        %1221 = vmatprep.subr.mxu0 0.0
        %1222 = vmatpush1.msra.mxu0 0.0
        %1223 = vmatprep.subr.mxu0 0.0
        %1224 = vmatpush1.msra.mxu0 0.0
        %1225 = vmatprep.subr.mxu0 0.0
        %1226 = vmatpush1.msra.mxu0 0.0
        %1227 = vmatprep.subr.mxu0 0.0
        %1228 = vmatpush1.msra.mxu0 0.0
        %1229 = vmatprep.subr.mxu0 0.0
        %1230 = vmatpush1.msra.mxu0 0.0
        %1231 = vmatprep.subr.mxu0 0.0
        %1232 = vmatpush1.msra.mxu0 0.0
        %1233 = vmatprep.subr.mxu0 0.0
        %1234 = vmatpush1.msra.mxu0 0.0
        %1235 = vmatprep.subr.mxu0 0.0
        %1236 = vmatpush1.msra.mxu0 0.0
        %1237 = vmatprep.subr.mxu0 0.0
        %1238 = vmatpush1.msra.mxu0 0.0
        %1239 = vmatprep.subr.mxu0 0.0
        %1240 = vmatpush1.msra.mxu0 0.0
        %1241 = vmatprep.subr.mxu0 0.0
        %1242 = vmatpush1.msra.mxu0 0.0
        %1243 = vmatprep.subr.mxu0 0.0
        %1244 = vmatpush1.msra.mxu0 0.0
        %1245 = vmatprep.subr.mxu0 0.0
        %1246 = vmatpush1.msra.mxu0 0.0
        %1247 = vmatprep.subr.mxu0 0.0
        %1248 = vmatpush1.msra.mxu0 0.0
        %1249 = vmatprep.subr.mxu0 0.0
        %1250 = vmatpush1.msra.mxu0 0.0
        %1251 = vmatprep.subr.mxu0 0.0
        %1252 = vmatpush1.msra.mxu0 0.0
        %1253 = vmatprep.subr.mxu0 0.0
        %1254 = vmatpush1.msra.mxu0 0.0
        %1255 = vmatprep.subr.mxu0 0.0
        %1256 = vmatpush1.msra.mxu0 0.0
        %1257 = vmatprep.subr.mxu0 0.0
        %1258 = vmatpush1.msra.mxu0 0.0
        %1259 = vmatprep.subr.mxu0 0.0
        %1260 = vmatpush1.msra.mxu0 0.0
        %1261 = vmatprep.subr.mxu0 0.0
        %1262 = vmatpush1.msra.mxu0 0.0
        %1263 = vmatprep.subr.mxu0 0.0
        %1264 = vmatpush1.msra.mxu0 0.0
        %1265 = vmatprep.subr.mxu0 0.0
        %1266 = vmatpush1.msra.mxu0 0.0
        %1267 = vmatprep.subr.mxu0 0.0
        %1268 = vmatpush1.msra.mxu0 0.0
        %1269 = vmatprep.subr.mxu0 0.0
        %1270 = vmatpush1.msra.mxu0 0.0
        %1271 = vmatprep.mubr.f32.mxu0 0.0
        %1272 = vmatmul.mubr.f32.gmra.mrb[0].mxu0 %v1184
        %v1273 = vpop.f32.mrb[0].mxu0
        %v1274 = vadd.f32 0.0, %v1273
        %v1275 = vpop.f32.mrb[0].mxu0
        %1276 = vmatprep.mubr.f32.mxu0 0.0
        %1277 = vmatmul.mubr.f32.gmra.mrb[0].mxu0 %v1187
        %v1278 = vpop.f32.mrb[0].mxu0
        %v1279 = vadd.f32 0.0, %v1278
        %v1280 = vpop.f32.mrb[0].mxu0
        %1281 = vmatprep.mubr.f32.mxu0 0.0
        %1282 = vmatmul.mubr.f32.gmra.mrb[0].mxu0 %v1190
        %v1283 = vpop.f32.mrb[0].mxu0
        %v1284 = vadd.f32 0.0, %v1283
        %v1285 = vpop.f32.mrb[0].mxu0
        %1286 = vmatprep.mubr.f32.mxu0 0.0
        %1287 = vmatmul.mubr.f32.gmra.mrb[0].mxu0 %v1193
        %v1288 = vpop.f32.mrb[0].mxu0
        %v1289 = vadd.f32 0.0, %v1288
        %v1290 = vpop.f32.mrb[0].mxu0
        %1291 = vmatprep.mubr.f32.mxu0 0.0
        %1292 = vmatmul.mubr.f32.gmra.mrb[0].mxu0 %v1196
        %v1293 = vpop.f32.mrb[0].mxu0
        %v1294 = vadd.f32 0.0, %v1293
        %v1295 = vpop.f32.mrb[0].mxu0
        %1296 = vmatprep.mubr.f32.mxu0 0.0
        %1297 = vmatmul.mubr.f32.gmra.mrb[0].mxu0 %v1199
        %v1298 = vpop.f32.mrb[0].mxu0
        %v1299 = vadd.f32 0.0, %v1298
        %v1300 = vpop.f32.mrb[0].mxu0
        %1301 = vmatprep.mubr.f32.mxu0 0.0
        %1302 = vmatmul.mubr.f32.gmra.mrb[0].mxu0 %v1202
        %v1303 = vpop.f32.mrb[0].mxu0
        %v1304 = vadd.f32 0.0, %v1303
        %v1305 = vpop.f32.mrb[0].mxu0
        %1306 = vmatprep.mubr.f32.mxu0 0.0
        %1307 = vmatmul.mubr.f32.gmra.mrb[0].mxu0 %v1205
        %v1308 = vpop.f32.mrb[0].mxu0
        %v1309 = vadd.f32 0.0, %v1308
        %v1310 = vpop.f32.mrb[0].mxu0
        %1311 = vdwg.mxu0
        %v1313 = vsel %vm1118, %v1137, 0
        %1315 = vmatprep.subr.mxu0 0.0
        %1316 = vmatpush1.msra.mxu0 %v1182
        %1317 = vmatprep.subr.mxu0 0.0
        %1318 = vmatpush1.msra.mxu0 0.0
        %1319 = vmatprep.subr.mxu0 0.0
        %1320 = vmatpush1.msra.mxu0 0.0
        %1321 = vmatprep.subr.mxu0 0.0
        %1322 = vmatpush1.msra.mxu0 0.0
        %1323 = vmatprep.subr.mxu0 0.0
        %1324 = vmatpush1.msra.mxu0 0.0
        %1325 = vmatprep.subr.mxu0 0.0
        %1326 = vmatpush1.msra.mxu0 0.0
        %1327 = vmatprep.subr.mxu0 0.0
        %1328 = vmatpush1.msra.mxu0 0.0
        %1329 = vmatprep.subr.mxu0 0.0
        %1330 = vmatpush1.msra.mxu0 0.0
        %1331 = vmatprep.subr.mxu0 0.0
        %1332 = vmatpush1.msra.mxu0 0.0
        %1333 = vmatprep.subr.mxu0 0.0
        %1334 = vmatpush1.msra.mxu0 0.0
        %1335 = vmatprep.subr.mxu0 0.0
        %1336 = vmatpush1.msra.mxu0 0.0
        %1337 = vmatprep.subr.mxu0 0.0
        %1338 = vmatpush1.msra.mxu0 0.0
        %1339 = vmatprep.subr.mxu0 0.0
        %1340 = vmatpush1.msra.mxu0 0.0
        %1341 = vmatprep.subr.mxu0 0.0
        %1342 = vmatpush1.msra.mxu0 0.0
        %1343 = vmatprep.subr.mxu0 0.0
        %1344 = vmatpush1.msra.mxu0 0.0
        %1345 = vmatprep.subr.mxu0 0.0
        %1346 = vmatpush1.msra.mxu0 0.0
        %1347 = vmatprep.subr.mxu0 0.0
        %1348 = vmatpush1.msra.mxu0 0.0
        %1349 = vmatprep.subr.mxu0 0.0
        %1350 = vmatpush1.msra.mxu0 0.0
        %1351 = vmatprep.subr.mxu0 0.0
        %1352 = vmatpush1.msra.mxu0 0.0
        %1353 = vmatprep.subr.mxu0 0.0
        %1354 = vmatpush1.msra.mxu0 0.0
        %1355 = vmatprep.subr.mxu0 0.0
        %1356 = vmatpush1.msra.mxu0 0.0
        %1357 = vmatprep.subr.mxu0 0.0
        %1358 = vmatpush1.msra.mxu0 0.0
        %1359 = vmatprep.subr.mxu0 0.0
        %1360 = vmatpush1.msra.mxu0 0.0
        %1361 = vmatprep.subr.mxu0 0.0
        %1362 = vmatpush1.msra.mxu0 0.0
        %1363 = vmatprep.subr.mxu0 0.0
        %1364 = vmatpush1.msra.mxu0 0.0
        %1365 = vmatprep.subr.mxu0 0.0
        %1366 = vmatpush1.msra.mxu0 0.0
        %1367 = vmatprep.subr.mxu0 0.0
        %1368 = vmatpush1.msra.mxu0 0.0
        %1369 = vmatprep.subr.mxu0 0.0
        %1370 = vmatpush1.msra.mxu0 0.0
        %1371 = vmatprep.subr.mxu0 0.0
        %1372 = vmatpush1.msra.mxu0 0.0
        %1373 = vmatprep.subr.mxu0 0.0
        %1374 = vmatpush1.msra.mxu0 0.0
        %1375 = vmatprep.subr.mxu0 0.0
        %1376 = vmatpush1.msra.mxu0 0.0
        %1377 = vmatprep.subr.mxu0 0.0
        %1378 = vmatpush1.msra.mxu0 0.0
        %1379 = vmatprep.mubr.f32.mxu0 0.0
        %1380 = vmatmul.mubr.f32.gmra.mrb[0].mxu0 %v1313
        %v1381 = vpop.f32.mrb[0].mxu0
        %v1382 = vadd.f32 0.0, %v1381
        %v1383 = vpop.f32.mrb[0].mxu0
        %1384 = vdwg.mxu0
        %v1386 = vcombine.high %v586, %v586
        %v1388 = vunpack.c.l.s4 1966171168
        %v1389 = vunpack.c.0.s8 %v1388
        %v1390 = vlaneseq
        %v1391 = vshrl.u32 %v1390, 7
        %v1392 = vsub.s32 %v1389, %v1391
        %v1393 = vrot.slane %v586, %v1392
        %v1395 = vunpack.c.l.s4 1966171168
        %v1396 = vunpack.c.0.s8 %v1395
        %v1397 = vlaneseq
        %v1398 = vshrl.u32 %v1397, 7
        %v1399 = vsub.s32 %v1396, %v1398
        %v1400 = vrot.slane %v1386, %v1399
        %v1401 = vcombine.high %v1393, %v1393
        %v1402 = vcombine.high %v1400, %v1400
        %v1404 = vunpack.c.l.s4 1966171168
        %v1405 = vunpack.c.0.s8 %v1404
        %v1406 = vlaneseq
        %v1407 = vshrl.u32 %v1406, 7
        %v1408 = vsub.s32 %v1405, %v1407
        %v1409 = vrot.slane %v1393, %v1408
        %v1411 = vunpack.c.l.s4 1966171168
        %v1412 = vunpack.c.0.s8 %v1411
        %v1413 = vlaneseq
        %v1414 = vshrl.u32 %v1413, 7
        %v1415 = vsub.s32 %v1412, %v1414
        %v1416 = vrot.slane %v1400, %v1415
        %v1418 = vunpack.c.l.s4 1966171168
        %v1419 = vunpack.c.0.s8 %v1418
        %v1420 = vlaneseq
        %v1421 = vshrl.u32 %v1420, 7
        %v1422 = vsub.s32 %v1419, %v1421
        %v1423 = vrot.slane %v1401, %v1422
        %v1425 = vunpack.c.l.s4 1966171168
        %v1426 = vunpack.c.0.s8 %v1425
        %v1427 = vlaneseq
        %v1428 = vshrl.u32 %v1427, 7
        %v1429 = vsub.s32 %v1426, %v1428
        %v1430 = vrot.slane %v1402, %v1429
        %v1431 = vcombine.high %v1409, %v1409
        %v1432 = vcombine.high %v1416, %v1416
        %v1433 = vcombine.high %v1423, %v1423
        %v1434 = vcombine.high %v1430, %v1430
        %v1435 = vlaneseq
        %v1436 = vshrl.u32 %v1435, 7
        %v1437 = vsub.s32 0, %v1436
        %v1438 = vrot.slane %v1409, %v1437
        %v1439 = vlaneseq
        %v1440 = vshrl.u32 %v1439, 7
        %v1441 = vsub.s32 0, %v1440
        %v1442 = vrot.slane %v1423, %v1441
        %v1443 = vlaneseq
        %v1444 = vshrl.u32 %v1443, 7
        %v1445 = vsub.s32 0, %v1444
        %v1446 = vrot.slane %v1431, %v1445
        %v1447 = vlaneseq
        %v1448 = vshrl.u32 %v1447, 7
        %v1449 = vsub.s32 0, %v1448
        %v1450 = vrot.slane %v1433, %v1449
        %v1451 = vlaneseq
        %v1452 = vshrl.u32 %v1451, 7
        %v1453 = vsub.s32 0, %v1452
        %v1454 = vrot.slane %v1416, %v1453
        %v1455 = vlaneseq
        %v1456 = vshrl.u32 %v1455, 7
        %v1457 = vsub.s32 0, %v1456
        %v1458 = vrot.slane %v1430, %v1457
        %v1459 = vlaneseq
        %v1460 = vshrl.u32 %v1459, 7
        %v1461 = vsub.s32 0, %v1460
        %v1462 = vrot.slane %v1432, %v1461
        %v1463 = vlaneseq
        %v1464 = vshrl.u32 %v1463, 7
        %v1465 = vsub.s32 0, %v1464
        %v1466 = vrot.slane %v1434, %v1465
        %1467 = vrot.lane.b32.xlu0 %v1438, 64
        %v1468 = vpop.permute.xlu0 %1467
        %1469 = vrot.lane.b32.xlu0 %v1442, 64
        %v1470 = vpop.permute.xlu0 %1469
        %1471 = vrot.lane.b32.xlu0 %v1446, 64
        %v1472 = vpop.permute.xlu0 %1471
        %1473 = vrot.lane.b32.xlu0 %v1450, 64
        %v1474 = vpop.permute.xlu0 %1473
        %1475 = vrot.lane.b32.xlu0 %v1454, 64
        %v1476 = vpop.permute.xlu0 %1475
        %1477 = vrot.lane.b32.xlu0 %v1458, 64
        %v1478 = vpop.permute.xlu0 %1477
        %1479 = vrot.lane.b32.xlu0 %v1462, 64
        %v1480 = vpop.permute.xlu0 %1479
        %1481 = vrot.lane.b32.xlu0 %v1466, 64
        %v1482 = vpop.permute.xlu0 %1481
        %v1491 = vmul.f32 %v1274, %v1468
        %v1492 = vmul.f32 %v1279, %v1470
        %v1493 = vmul.f32 %v1284, %v1472
        %v1494 = vmul.f32 %v1289, %v1474
        %v1495 = vmul.f32 %v1294, %v1476
        %v1496 = vmul.f32 %v1299, %v1478
        %v1497 = vmul.f32 %v1304, %v1480
        %v1498 = vmul.f32 %v1309, %v1482
        %v1499 = vsel %vm515, %v1491, 0.0
        %v1500 = vsel %vm515, %v1492, 0.0
        %v1501 = vadd.f32 %v1499, %v1500
        %v1502 = vsel %vm515, %v1493, 0.0
        %v1503 = vadd.f32 %v1501, %v1502
        %v1504 = vsel %vm515, %v1494, 0.0
        %v1505 = vadd.f32 %v1503, %v1504
        %v1506 = vsel %vm515, %v1495, 0.0
        %v1507 = vadd.f32 %v1505, %v1506
        %v1508 = vsel %vm515, %v1496, 0.0
        %v1509 = vadd.f32 %v1507, %v1508
        %v1510 = vsel %vm515, %v1497, 0.0
        %v1511 = vadd.f32 %v1509, %v1510
        %v1512 = vsel %vm515, %v1498, 0.0
        %v1513 = vadd.f32 %v1511, %v1512
        %v1514 = vld [vmem:[#allocation4] sm:$0xff]
        %v1515 = vmul.f32 %v1382, %v1514
        %v1516 = vadd.f32 %v1515, %v1513
        %1517 = vst.msk [vmem:[#allocation4] sm:$0xff] %vm515, %v1516
        %p1518 = scmp.eq.s32.totalorder %s31, 1
        // Predicated region
        $region73: #{mha_forward.1} parent=67 // pred_check
          %p1519 = pneg %p1518
        $region74: #{mha_forward.1} parent=67 // pred_check_branch
          %1521 = sbr.rel (%p1519) target = $region76
        $region75: #{mha_forward.1} parent=67 // pred_region
          %v1522 = vld [vmem:[#allocation3] sm:$0xff]
          %v1523 = vld [vmem:[%s11] sm:$0xff]
          %v1525 = vsel %vm1118, %v1522, 0
          %1527 = vmatprep.subr.mxu0 0.0
          %1528 = vmatpush1.msra.mxu0 %v1523
          %1529 = vmatprep.subr.mxu0 0.0
          %1530 = vmatpush1.msra.mxu0 0.0
          %1531 = vmatprep.subr.mxu0 0.0
          %1532 = vmatpush1.msra.mxu0 0.0
          %1533 = vmatprep.subr.mxu0 0.0
          %1534 = vmatpush1.msra.mxu0 0.0
          %1535 = vmatprep.subr.mxu0 0.0
          %1536 = vmatpush1.msra.mxu0 0.0
          %1537 = vmatprep.subr.mxu0 0.0
          %1538 = vmatpush1.msra.mxu0 0.0
          %1539 = vmatprep.subr.mxu0 0.0
          %1540 = vmatpush1.msra.mxu0 0.0
          %1541 = vmatprep.subr.mxu0 0.0
          %1542 = vmatpush1.msra.mxu0 0.0
          %1543 = vmatprep.subr.mxu0 0.0
          %1544 = vmatpush1.msra.mxu0 0.0
          %1545 = vmatprep.subr.mxu0 0.0
          %1546 = vmatpush1.msra.mxu0 0.0
          %1547 = vmatprep.subr.mxu0 0.0
          %1548 = vmatpush1.msra.mxu0 0.0
          %1549 = vmatprep.subr.mxu0 0.0
          %1550 = vmatpush1.msra.mxu0 0.0
          %1551 = vmatprep.subr.mxu0 0.0
          %1552 = vmatpush1.msra.mxu0 0.0
          %1553 = vmatprep.subr.mxu0 0.0
          %1554 = vmatpush1.msra.mxu0 0.0
          %1555 = vmatprep.subr.mxu0 0.0
          %1556 = vmatpush1.msra.mxu0 0.0
          %1557 = vmatprep.subr.mxu0 0.0
          %1558 = vmatpush1.msra.mxu0 0.0
          %1559 = vmatprep.subr.mxu0 0.0
          %1560 = vmatpush1.msra.mxu0 0.0
          %1561 = vmatprep.subr.mxu0 0.0
          %1562 = vmatpush1.msra.mxu0 0.0
          %1563 = vmatprep.subr.mxu0 0.0
          %1564 = vmatpush1.msra.mxu0 0.0
          %1565 = vmatprep.subr.mxu0 0.0
          %1566 = vmatpush1.msra.mxu0 0.0
          %1567 = vmatprep.subr.mxu0 0.0
          %1568 = vmatpush1.msra.mxu0 0.0
          %1569 = vmatprep.subr.mxu0 0.0
          %1570 = vmatpush1.msra.mxu0 0.0
          %1571 = vmatprep.subr.mxu0 0.0
          %1572 = vmatpush1.msra.mxu0 0.0
          %1573 = vmatprep.subr.mxu0 0.0
          %1574 = vmatpush1.msra.mxu0 0.0
          %1575 = vmatprep.subr.mxu0 0.0
          %1576 = vmatpush1.msra.mxu0 0.0
          %1577 = vmatprep.subr.mxu0 0.0
          %1578 = vmatpush1.msra.mxu0 0.0
          %1579 = vmatprep.subr.mxu0 0.0
          %1580 = vmatpush1.msra.mxu0 0.0
          %1581 = vmatprep.subr.mxu0 0.0
          %1582 = vmatpush1.msra.mxu0 0.0
          %1583 = vmatprep.subr.mxu0 0.0
          %1584 = vmatpush1.msra.mxu0 0.0
          %1585 = vmatprep.subr.mxu0 0.0
          %1586 = vmatpush1.msra.mxu0 0.0
          %1587 = vmatprep.subr.mxu0 0.0
          %1588 = vmatpush1.msra.mxu0 0.0
          %1589 = vmatprep.subr.mxu0 0.0
          %1590 = vmatpush1.msra.mxu0 0.0
          %1591 = vmatprep.mubr.f32.mxu0 0.0
          %1592 = vmatmul.mubr.f32.gmra.mrb[0].mxu0 %v1525
          %v1593 = vpop.f32.mrb[0].mxu0
          %v1594 = vadd.f32 0.0, %v1593
          %v1595 = vpop.f32.mrb[0].mxu0
          %1596 = vdwg.mxu0
          %v1597 = vld [vmem:[#allocation4] sm:$0xff]
          %v1598 = vrcp.pop %v1594
          %v1599 = vmul.f32 %v1597, %v1598
          %v1600 = vld [vmem:[%s9] sm:$0x1]
          %v1602 = vlaneseq
          %v1603 = vshrl.u32 %v1602, 7
          %v1604 = vsub.s32 0, %v1603
          %v1605 = vrot.slane %v1600, %v1604
          %v1607 = vadd.f32 %v1599, %v1605
          %v1608 = vld [vmem:[%s6] sm:$0xff]
          %v1609 = vld [vmem:[%s6 + $0x8] sm:$0xff]
          %v1610 = vld [vmem:[%s6 + $0x10] sm:$0xff]
          %v1611 = vld [vmem:[%s6 + $0x18] sm:$0xff]
          %v1612 = vld [vmem:[%s6 + $0x20] sm:$0xff]
          %v1613 = vld [vmem:[%s6 + $0x28] sm:$0xff]
          %v1614 = vld [vmem:[%s6 + $0x30] sm:$0xff]
          %v1615 = vld [vmem:[%s6 + $0x38] sm:$0xff]
          %v1617 = vsel %vm515, %v1607, 0
          %1619 = vmatprep.subr.mxu0 0.0
          %1620 = vmatpush1.msra.mxu0 %v1608
          %1621 = vmatprep.subr.mxu0 0.0
          %1622 = vmatpush1.msra.mxu0 %v1609
          %1623 = vmatprep.subr.mxu0 0.0
          %1624 = vmatpush1.msra.mxu0 %v1610
          %1625 = vmatprep.subr.mxu0 0.0
          %1626 = vmatpush1.msra.mxu0 %v1611
          %1627 = vmatprep.subr.mxu0 0.0
          %1628 = vmatpush1.msra.mxu0 %v1612
          %1629 = vmatprep.subr.mxu0 0.0
          %1630 = vmatpush1.msra.mxu0 %v1613
          %1631 = vmatprep.subr.mxu0 0.0
          %1632 = vmatpush1.msra.mxu0 %v1614
          %1633 = vmatprep.subr.mxu0 0.0
          %1634 = vmatpush1.msra.mxu0 %v1615
          %1635 = vmatprep.subr.mxu0 0.0
          %1636 = vmatpush1.msra.mxu0 0.0
          %1637 = vmatprep.subr.mxu0 0.0
          %1638 = vmatpush1.msra.mxu0 0.0
          %1639 = vmatprep.subr.mxu0 0.0
          %1640 = vmatpush1.msra.mxu0 0.0
          %1641 = vmatprep.subr.mxu0 0.0
          %1642 = vmatpush1.msra.mxu0 0.0
          %1643 = vmatprep.subr.mxu0 0.0
          %1644 = vmatpush1.msra.mxu0 0.0
          %1645 = vmatprep.subr.mxu0 0.0
          %1646 = vmatpush1.msra.mxu0 0.0
          %1647 = vmatprep.subr.mxu0 0.0
          %1648 = vmatpush1.msra.mxu0 0.0
          %1649 = vmatprep.subr.mxu0 0.0
          %1650 = vmatpush1.msra.mxu0 0.0
          %1651 = vmatprep.subr.mxu0 0.0
          %1652 = vmatpush1.msra.mxu0 0.0
          %1653 = vmatprep.subr.mxu0 0.0
          %1654 = vmatpush1.msra.mxu0 0.0
          %1655 = vmatprep.subr.mxu0 0.0
          %1656 = vmatpush1.msra.mxu0 0.0
          %1657 = vmatprep.subr.mxu0 0.0
          %1658 = vmatpush1.msra.mxu0 0.0
          %1659 = vmatprep.subr.mxu0 0.0
          %1660 = vmatpush1.msra.mxu0 0.0
          %1661 = vmatprep.subr.mxu0 0.0
          %1662 = vmatpush1.msra.mxu0 0.0
          %1663 = vmatprep.subr.mxu0 0.0
          %1664 = vmatpush1.msra.mxu0 0.0
          %1665 = vmatprep.subr.mxu0 0.0
          %1666 = vmatpush1.msra.mxu0 0.0
          %1667 = vmatprep.subr.mxu0 0.0
          %1668 = vmatpush1.msra.mxu0 0.0
          %1669 = vmatprep.subr.mxu0 0.0
          %1670 = vmatpush1.msra.mxu0 0.0
          %1671 = vmatprep.subr.mxu0 0.0
          %1672 = vmatpush1.msra.mxu0 0.0
          %1673 = vmatprep.subr.mxu0 0.0
          %1674 = vmatpush1.msra.mxu0 0.0
          %1675 = vmatprep.subr.mxu0 0.0
          %1676 = vmatpush1.msra.mxu0 0.0
          %1677 = vmatprep.subr.mxu0 0.0
          %1678 = vmatpush1.msra.mxu0 0.0
          %1679 = vmatprep.subr.mxu0 0.0
          %1680 = vmatpush1.msra.mxu0 0.0
          %1681 = vmatprep.subr.mxu0 0.0
          %1682 = vmatpush1.msra.mxu0 0.0
          %1683 = vmatprep.mubr.f32.mxu0 0.0
          %1684 = vmatmul.mubr.f32.gmra.mrb[0].mxu0 %v1617
          %v1685 = vpop.f32.mrb[0].mxu0
          %v1686 = vadd.f32 0.0, %v1685
          %v1687 = vpop.f32.mrb[0].mxu0
          %1688 = vdwg.mxu0
          %1689 = vst.msk [vmem:[%s465] sm:$0xff] %vm515, %v1686
        $region76: #{mha_forward.1} parent=67 // pred_fallthru
          _
        %s1690 = sand.u32 %s317, 1
        %s1691 = scalar_lea.sflag [#allocation6], %s1690
        %s1692 = sand.u32 %s317, 1
        %s1693 = smul.addr %s1692, 8
        %s1694 = scalar_lea.vmem [#allocation5], %s1693
        // Predicated region
        $region77: #{mha_forward.1} parent=67 // pred_check
          %p1695 = pneg %p327
        $region78: #{mha_forward.1} parent=67 // pred_check_branch
          %1697 = sbr.rel (%p1695) target = $region80
        $region79: #{mha_forward.1} parent=67 // pred_region
          %s1699 = ssub.s32 128, 128
          %1700 = vsyncadd %s1691, %s1699
          %s1701 = smul.addr %s30, 128
          %s1702 = scalar_lea.hbm %s12, %s1701
          %s1704 = sshll.u32 %s1694, 4
          %s1705 = int_to_ptr.vmem [resolvable:$true] %s1704
          %1707 = dma.vmem_to_hbm [thread:$0]  %s1705, 128, %s1702, %s1691
        $region80: #{mha_forward.1} parent=67 // pred_fallthru
          _
      $region68: #{mha_forward.1} parent=5 // pred_fallthru
        _
      %p1708 = scmp.le.s32.totalorder 2, %s21
      // Predicated region
      $region81: #{mha_forward.1} parent=5 // pred_check
        %p1709 = pneg %p1708
      $region82: #{mha_forward.1} parent=5 // pred_check_branch
        %1711 = sbr.rel (%p1709) target = $region84
      $region83: #{mha_forward.1} parent=5 // pred_region
        %s1712 = ssub.s32 %s21, 2
        // Predicated region
        $region85: #{mha_forward.1} parent=83 // pred_check
          %p1713 = pneg %p333
        $region86: #{mha_forward.1} parent=83 // pred_check_branch
          %1715 = sbr.rel (%p1713) target = $region88
        $region87: #{mha_forward.1} parent=83 // pred_region
          %s1716 = sand.u32 %s318, 1
          %s1717 = scalar_lea.sflag [#allocation6], %s1716
          %s1718 = sand.u32 %s318, 1
          %s1719 = smul.addr %s1718, 8
          %s1720 = scalar_lea.vmem [#allocation5], %s1719
          %1721 = dma.done %s1717, 128
        $region88: #{mha_forward.1} parent=83 // pred_fallthru
          _
      $region84: #{mha_forward.1} parent=5 // pred_fallthru
        _
    $region6: #{mha_forward.1} parent=1 // loop_footer
      %s25 = sadd.s32 1, %s21
    $region7: #{mha_forward.1} parent=1 // loop_footer_branch
      %20 = sbr.rel target = $region3
    $region8: #{mha_forward.1} parent=1 // loop_exit
      _
    %1722 = vsyncpa [#allocation6], 1
    %s1723 = scalar_lea.sflag [#allocation6], 1
    %1724 = vsyncpa %s1723, 1

</llo_original>
